<compile_context>
chip_gen: v5e
topology: v5e:2x2
jax: 0.10.0
libtpu: 0.0.40
codegen_flags: <defaults>
</compile_context>

<pallas_src>
import functools

import jax
import jax.numpy as jnp
from jax.experimental import pallas as pl
from jax.experimental.pallas import tpu as pltpu

KSIZE = 5
PAD = 2
PAD_FRONT = 8          # sublane-aligned start of the data region in the scratch
EPS = 1e-5
HIDDEN = 512           # fixed by the module definition
LANE = 128             # TPU vreg lane width


def _round_up(n, m):
    return (n + m - 1) // m * m


def _vmem_limit_bytes():
    """Generation-aware scoped-VMEM cap (v5e/v6e: 128 MiB, v7x: 64 MiB)."""
    cap = 64 * 1024 * 1024
    try:
        info = pltpu.get_tpu_info()
        cap = getattr(info, "vmem_capacity_bytes", cap)
    except Exception:
        pass
    # leave headroom for double-buffering / compiler scratch
    return min(int(cap * 3 // 4), 100 * 1024 * 1024)


# ----------------------------------------------------------------------------
# Conv(k=5, pad=2) + BN-statistics pass.  Optionally applies the *previous*
# layer's BatchNorm (y*scale+shift) + tanh while filling the halo scratch.
# Outputs:
#   y      (T, Cout_p) bf16  pre-BN conv output of THIS layer (no bias)
#   scale  (1, Cout_p) f32   during grid: running sum ; finalized: rstd*gamma
#   shift  (1, Cout_p) f32   during grid: running sumsq; finalized: beta-mu*scale
# ----------------------------------------------------------------------------
def _conv_bn_stats_kernel(*refs, seq_len, n_count, fuse_prev_bn):
    if fuse_prev_bn:
        (xin_ref, scale_in_ref, shift_in_ref, w_ref, gamma_ref, beta_ref,
         y_ref, scale_out_ref, shift_out_ref, xp_ref) = refs
    else:
        (xin_ref, w_ref, gamma_ref, beta_ref,
         y_ref, scale_out_ref, shift_out_ref, xp_ref) = refs

    b = pl.program_id(0)

    @pl.when(b == 0)
    def _init():
        xp_ref[...] = jnp.zeros_like(xp_ref)           # halo rows stay zero
        scale_out_ref[...] = jnp.zeros_like(scale_out_ref)   # running sum
        shift_out_ref[...] = jnp.zeros_like(shift_out_ref)   # running sumsq

    # ---- prologue: fill the bf16 halo scratch -------------------------------
    if fuse_prev_bn:
        # Previous layer's BatchNorm folded to one FMA, then tanh, all in f32.
        x = xin_ref[...].astype(jnp.float32)
        x = jnp.tanh(x * scale_in_ref[...] + shift_in_ref[...])
        xp_ref[PAD_FRONT:PAD_FRONT + seq_len, :] = x.astype(jnp.bfloat16)
    else:
        # First layer: raw (lane-padded) input, already bf16.
        xp_ref[PAD_FRONT:PAD_FRONT + seq_len, :] = xin_ref[...]

    # ---- conv: 5 shifted (T,Cin)@(Cin,Cout) bf16 MXU matmuls, f32 accum -----
    o0 = PAD_FRONT - PAD
    acc = jnp.dot(xp_ref[o0:o0 + seq_len, :], w_ref[0],
                  preferred_element_type=jnp.float32)
    for k in range(1, KSIZE):
        o = o0 + k
        acc = acc + jnp.dot(xp_ref[o:o + seq_len, :], w_ref[k],
                            preferred_element_type=jnp.float32)

    # bf16 carrier between layers (halves the dominant HBM stream).
    y_ref[...] = acc.astype(y_ref.dtype)

    # BN statistics from the f32 accumulator while it is hot.
    scale_out_ref[...] += jnp.sum(acc, axis=0, keepdims=True)
    shift_out_ref[...] += jnp.sum(acc * acc, axis=0, keepdims=True)

    @pl.when(b == pl.num_programs(0) - 1)
    def _finalize():
        # NOTE: E[y^2]-E[y]^2 in f32; clamp guards tiny negative cancellation.
        inv_n = 1.0 / n_count
        mu = scale_out_ref[...] * inv_n
        var = shift_out_ref[...] * inv_n - mu * mu
        rstd = jax.lax.rsqrt(jnp.maximum(var, 0.0) + EPS)
        s = rstd * gamma_ref[...]
        scale_out_ref[...] = s
        shift_out_ref[...] = beta_ref[...] - mu * s


# ----------------------------------------------------------------------------
# Final layer's BatchNorm (single FMA, no tanh) as a small elementwise pass.
# ----------------------------------------------------------------------------
def _bn_final_kernel(y_ref, scale_ref, shift_ref, o_ref):
    y = y_ref[...].astype(jnp.float32)
    o_ref[...] = (y * scale_ref[...] + shift_ref[...]).astype(o_ref.dtype)


# ----------------------------------------------------------------------------
# Layer wrappers
# ----------------------------------------------------------------------------
def conv_bn_stats_layer(x_btc, layer, prev_scale, prev_shift, *, fuse_prev_bn):
    """x_btc: (B, T, Cin_p) bf16 channels-last carrier (pre-BN y of prev layer,
    or the lane-padded raw input for the first layer)."""
    B, T, cin_p = x_btc.shape
    coutp = layer["cout_p"]

    kernel = functools.partial(_conv_bn_stats_kernel, seq_len=T,
                               n_count=B * T, fuse_prev_bn=fuse_prev_bn)

    vec_in = pl.BlockSpec((1, cin_p), lambda b: (0, 0))
    vec_out = pl.BlockSpec((1, coutp), lambda b: (0, 0))

    in_specs = [pl.BlockSpec((None, T, cin_p), lambda b: (b, 0, 0))]
    args = [x_btc]
    if fuse_prev_bn:
        in_specs += [vec_in, vec_in]
        args += [prev_scale, prev_shift]
    in_specs += [pl.BlockSpec((KSIZE, cin_p, coutp), lambda b: (0, 0, 0)),
                 vec_out, vec_out]
    args += [layer["w"], layer["gamma"], layer["beta"]]

    y, scale, shift = pl.pallas_call(
        kernel,
        grid=(B,),
        in_specs=in_specs,
        out_specs=[pl.BlockSpec((None, T, coutp), lambda b: (b, 0, 0)),
                   vec_out, vec_out],                      # resident accumulators
        out_shape=[jax.ShapeDtypeStruct((B, T, coutp), jnp.bfloat16),
                   jax.ShapeDtypeStruct((1, coutp), jnp.float32),
                   jax.ShapeDtypeStruct((1, coutp), jnp.float32)],
        scratch_shapes=[pltpu.VMEM((T + PAD_FRONT + PAD, cin_p), jnp.bfloat16)],
        compiler_params=pltpu.CompilerParams(
            dimension_semantics=("arbitrary",),   # stats reduce across the grid
            vmem_limit_bytes=_vmem_limit_bytes()),
    )(*args)
    return y, scale, shift


def bn_final(y, scale, shift):
    B, T, coutp = y.shape
    return pl.pallas_call(
        _bn_final_kernel,
        grid=(B,),
        in_specs=[pl.BlockSpec((None, T, coutp), lambda b: (b, 0, 0)),
                  pl.BlockSpec((1, coutp), lambda b: (0, 0)),
                  pl.BlockSpec((1, coutp), lambda b: (0, 0))],
        out_specs=pl.BlockSpec((None, T, coutp), lambda b: (b, 0, 0)),
        out_shape=jax.ShapeDtypeStruct((B, T, coutp), jnp.float32),
        compiler_params=pltpu.CompilerParams(
            dimension_semantics=("parallel",),    # independent -> v7x 2 TCs
            vmem_limit_bytes=_vmem_limit_bytes()),
    )(y, scale, shift)


# ----------------------------------------------------------------------------
# Parameters
# ----------------------------------------------------------------------------
def init_postnet_params(key, num_spec_feats):
    """Synthetic init matching the PyTorch module's parameter shapes."""
    layer_dims = ([(num_spec_feats, HIDDEN)] + [(HIDDEN, HIDDEN)] * 3
                  + [(HIDDEN, num_spec_feats)])
    params = []
    for i, (cin, cout) in enumerate(layer_dims):
        key, kw, kb, kg, kbt = jax.random.split(key, 5)
        gain = 5.0 / 3.0 if i < len(layer_dims) - 1 else 1.0   # tanh / linear
        fan_in, fan_out = cin * KSIZE, cout * KSIZE
        bound = gain * (6.0 / (fan_in + fan_out)) ** 0.5
        w = jax.random.uniform(kw, (cout, cin, KSIZE), jnp.float32, -bound, bound)
        b = jax.random.uniform(kb, (cout,), jnp.float32, -0.1, 0.1)
        gamma = 1.0 + 0.1 * jax.random.normal(kg, (cout,), jnp.float32)
        beta = 0.1 * jax.random.normal(kbt, (cout,), jnp.float32)
        params.append({"w": w, "b": b, "gamma": gamma, "beta": beta})
    return params


def prepare_postnet_params(params):
    """Hoist all layout work out of the forward path (done once).

    - weights -> (KSIZE, Cin_p, Cout_p) bf16, channel dims lane-padded to 128
    - gamma/beta -> (1, Cout_p) f32
    - conv bias dropped: exactly cancelled by training-mode BN mean subtraction
      (only valid for batch-statistics BN, as in the reference forward).
    """
    prepped = []
    for p in params:
        cout, cin, _ = p["w"].shape
        cout_p = _round_up(cout, LANE)
        cin_p = _round_up(cin, LANE)
        w = jnp.transpose(p["w"], (2, 1, 0))                  # (K, Cin, Cout)
        w = jnp.pad(w, ((0, 0), (0, cin_p - cin), (0, cout_p - cout)))
        w = w.astype(jnp.bfloat16)
        pad_c = ((0, cout_p - cout),)
        gamma = jnp.pad(p["gamma"], pad_c).reshape(1, cout_p).astype(jnp.float32)
        beta = jnp.pad(p["beta"], pad_c).reshape(1, cout_p).astype(jnp.float32)
        prepped.append({"w": w, "gamma": gamma, "beta": beta,
                        "cout": cout, "cout_p": cout_p, "cin_p": cin_p})
    return prepped


def postnet_forward(x_nct, prepped):
    """Postnet forward. x_nct: (B, num_spec_feats, T) like PyTorch NCT input."""
    B, C, T = x_nct.shape
    cin_p = prepped[0]["cin_p"]
    x = jnp.transpose(x_nct, (0, 2, 1))                        # (B, T, C)
    x = jnp.pad(x, ((0, 0), (0, 0), (0, cin_p - C))).astype(jnp.bfloat16)

    scale = shift = None
    for i, layer in enumerate(prepped):
        # Each conv pass also applies the *previous* layer's BN + tanh in its
        # prologue; x after the call is the pre-BN y of layer i (bf16).
        x, scale, shift = conv_bn_stats_layer(
            x, layer, scale, shift, fuse_prev_bn=(i > 0))

    out = bn_final(x, scale, shift)                            # last BN, no tanh
    out = out[..., :prepped[-1]["cout"]]                       # drop lane padding
    return jnp.transpose(out, (0, 2, 1)).astype(jnp.float32)   # back to NCT


# ----------------------------------------------------------------------------
# Pure-JAX reference (f32) for a sanity check
# ----------------------------------------------------------------------------
def _reference_forward(x_nct, params):
    x = x_nct
    n = len(params)
    for i, p in enumerate(params):
        xp = jnp.pad(x, ((0, 0), (0, 0), (PAD, PAD)))
        y = jax.lax.conv_general_dilated(
            xp, p["w"], window_strides=(1,), padding="VALID",
            dimension_numbers=("NCH", "OIH", "NCH"))
        y = y + p["b"][None, :, None]
        mean = jnp.mean(y, axis=(0, 2), keepdims=True)
        var = jnp.mean((y - mean) ** 2, axis=(0, 2), keepdims=True)
        y = (y - mean) * jax.lax.rsqrt(var + EPS)
        y = y * p["gamma"][None, :, None] + p["beta"][None, :, None]
        x = jnp.tanh(y) if i < n - 1 else y
    return x


if __name__ == "__main__":
    key = jax.random.PRNGKey(0)
    k_x, k_p = jax.random.split(key)

    B, NUM_SPEC_FEATS, T = 2, 16, 16
    x = jax.random.normal(k_x, (B, NUM_SPEC_FEATS, T), jnp.float32)
    params = init_postnet_params(k_p, NUM_SPEC_FEATS)
    prepped = prepare_postnet_params(params)

    out = postnet_forward(x, prepped)
    out = jax.block_until_ready(out)
    assert out.shape == (B, NUM_SPEC_FEATS, T), out.shape
    assert bool(jnp.all(jnp.isfinite(out)))

    ref = _reference_forward(x, params)
    max_err = float(jnp.max(jnp.abs(out - ref)))
    assert max_err < 0.25, f"mismatch vs reference: {max_err}"
    print("KERNEL_OK")
</pallas_src>

<mosaic_0001>
module attributes {stable_mosaic.version = 11 : i64} {
  func.func @_conv_bn_stats_kernel(%arg0: i32, %arg1: memref<1x16x128xbf16, #tpu.memory_space<vmem>>, %arg2: memref<5x128x512xbf16, #tpu.memory_space<vmem>>, %arg3: memref<1x512xf32, #tpu.memory_space<vmem>>, %arg4: memref<1x512xf32, #tpu.memory_space<vmem>>, %arg5: memref<1x16x512xbf16, #tpu.memory_space<vmem>>, %arg6: memref<1x512xf32, #tpu.memory_space<vmem>>, %arg7: memref<1x512xf32, #tpu.memory_space<vmem>>, %arg8: memref<26x128xbf16, #tpu.memory_space<vmem>>) attributes {dimension_semantics = [#tpu.dimension_semantics<arbitrary>], iteration_bounds = array<i64: 2>, scalar_prefetch = 0 : i64, scratch_operands = 1 : i64, tpu.core_type = #tpu.core_type<tc>, window_params = [{transform_indices = @transform_0, window_bounds = array<i64: 1, 16, 128>}, {pipeline_mode = #tpu.pipeline_mode<synchronous>, transform_indices = @transform_1, window_bounds = array<i64: 5, 128, 512>}, {pipeline_mode = #tpu.pipeline_mode<synchronous>, transform_indices = @transform_2, window_bounds = array<i64: 1, 512>}, {pipeline_mode = #tpu.pipeline_mode<synchronous>, transform_indices = @transform_3, window_bounds = array<i64: 1, 512>}, {transform_indices = @transform_4, window_bounds = array<i64: 1, 16, 512>}, {pipeline_mode = #tpu.pipeline_mode<synchronous>, transform_indices = @transform_5, window_bounds = array<i64: 1, 512>}, {pipeline_mode = #tpu.pipeline_mode<synchronous>, transform_indices = @transform_6, window_bounds = array<i64: 1, 512>}]} {
    %c0_i32 = arith.constant 0 : i32
    %0 = arith.cmpi eq, %arg0, %c0_i32 : i32
    %1 = arith.extui %0 : i1 to i32
    %c0_i32_0 = arith.constant 0 : i32
    %2 = arith.cmpi ne, %1, %c0_i32_0 : i32
    scf.if %2 {
      %cst_39 = arith.constant 0.000000e+00 : bf16
      %48 = vector.broadcast %cst_39 : bf16 to vector<26x128xbf16>
      %c0_40 = arith.constant 0 : index
      %c0_41 = arith.constant 0 : index
      %49 = vector.load %arg8[%c0_40, %c0_41] : memref<26x128xbf16, #tpu.memory_space<vmem>>, vector<26x128xbf16>
      tpu.vector_store %arg8[%c0_40, %c0_41], %48 {strides = array<i32>} : memref<26x128xbf16, #tpu.memory_space<vmem>>, vector<26x128xbf16>,
      %cst_42 = arith.constant 0.000000e+00 : f32
      %50 = vector.broadcast %cst_42 : f32 to vector<1x512xf32>
      %c0_43 = arith.constant 0 : index
      %c0_44 = arith.constant 0 : index
      %51 = vector.load %arg6[%c0_43, %c0_44] : memref<1x512xf32, #tpu.memory_space<vmem>>, vector<1x512xf32>
      tpu.vector_store %arg6[%c0_43, %c0_44], %50 {strides = array<i32>} : memref<1x512xf32, #tpu.memory_space<vmem>>, vector<1x512xf32>,
      %cst_45 = arith.constant 0.000000e+00 : f32
      %52 = vector.broadcast %cst_45 : f32 to vector<1x512xf32>
      %c0_46 = arith.constant 0 : index
      %c0_47 = arith.constant 0 : index
      %53 = vector.load %arg7[%c0_46, %c0_47] : memref<1x512xf32, #tpu.memory_space<vmem>>, vector<1x512xf32>
      tpu.vector_store %arg7[%c0_46, %c0_47], %52 {strides = array<i32>} : memref<1x512xf32, #tpu.memory_space<vmem>>, vector<1x512xf32>,
    } else {
    }
    %c0 = arith.constant 0 : index
    %c0_1 = arith.constant 0 : index
    %c0_2 = arith.constant 0 : index
    %3 = vector.load %arg1[%c0, %c0_1, %c0_2] : memref<1x16x128xbf16, #tpu.memory_space<vmem>>, vector<1x16x128xbf16>
    %4 = vector.shape_cast %3 : vector<1x16x128xbf16> to vector<16x128xbf16>
    %c8 = arith.constant 8 : index
    %c0_3 = arith.constant 0 : index
    %5 = vector.load %arg8[%c8, %c0_3] : memref<26x128xbf16, #tpu.memory_space<vmem>>, vector<16x128xbf16>
    tpu.vector_store %arg8[%c8, %c0_3], %4 {strides = array<i32>} : memref<26x128xbf16, #tpu.memory_space<vmem>>, vector<16x128xbf16>,
    %c6 = arith.constant 6 : index
    %c0_4 = arith.constant 0 : index
    %6 = vector.load %arg8[%c6, %c0_4] : memref<26x128xbf16, #tpu.memory_space<vmem>>, vector<16x128xbf16>
    %c0_5 = arith.constant 0 : index
    %c0_6 = arith.constant 0 : index
    %c0_7 = arith.constant 0 : index
    %7 = vector.load %arg2[%c0_5, %c0_6, %c0_7] : memref<5x128x512xbf16, #tpu.memory_space<vmem>>, vector<1x128x512xbf16>
    %8 = vector.shape_cast %7 : vector<1x128x512xbf16> to vector<128x512xbf16>
    %cst = arith.constant dense<0.000000e+00> : vector<16x512xf32>
    %9 = tpu.matmul %6, %8, %cst {dimension_numbers = #tpu.dot_dimension_numbers<[1], [0], [0], [1], [0, 0, 1, 1], [], []>} : vector<16x128xbf16>, vector<128x512xbf16>, vector<16x512xf32> -> vector<16x512xf32>
    %c7 = arith.constant 7 : index
    %c0_8 = arith.constant 0 : index
    %10 = vector.load %arg8[%c7, %c0_8] : memref<26x128xbf16, #tpu.memory_space<vmem>>, vector<16x128xbf16>
    %c1 = arith.constant 1 : index
    %c0_9 = arith.constant 0 : index
    %c0_10 = arith.constant 0 : index
    %11 = vector.load %arg2[%c1, %c0_9, %c0_10] : memref<5x128x512xbf16, #tpu.memory_space<vmem>>, vector<1x128x512xbf16>
    %12 = vector.shape_cast %11 : vector<1x128x512xbf16> to vector<128x512xbf16>
    %cst_11 = arith.constant dense<0.000000e+00> : vector<16x512xf32>
    %13 = tpu.matmul %10, %12, %cst_11 {dimension_numbers = #tpu.dot_dimension_numbers<[1], [0], [0], [1], [0, 0, 1, 1], [], []>} : vector<16x128xbf16>, vector<128x512xbf16>, vector<16x512xf32> -> vector<16x512xf32>
    %14 = arith.addf %9, %13 : vector<16x512xf32>
    %c8_12 = arith.constant 8 : index
    %c0_13 = arith.constant 0 : index
    %15 = vector.load %arg8[%c8_12, %c0_13] : memref<26x128xbf16, #tpu.memory_space<vmem>>, vector<16x128xbf16>
    %c2 = arith.constant 2 : index
    %c0_14 = arith.constant 0 : index
    %c0_15 = arith.constant 0 : index
    %16 = vector.load %arg2[%c2, %c0_14, %c0_15] : memref<5x128x512xbf16, #tpu.memory_space<vmem>>, vector<1x128x512xbf16>
    %17 = vector.shape_cast %16 : vector<1x128x512xbf16> to vector<128x512xbf16>
    %cst_16 = arith.constant dense<0.000000e+00> : vector<16x512xf32>
    %18 = tpu.matmul %15, %17, %cst_16 {dimension_numbers = #tpu.dot_dimension_numbers<[1], [0], [0], [1], [0, 0, 1, 1], [], []>} : vector<16x128xbf16>, vector<128x512xbf16>, vector<16x512xf32> -> vector<16x512xf32>
    %19 = arith.addf %14, %18 : vector<16x512xf32>
    %c9 = arith.constant 9 : index
    %c0_17 = arith.constant 0 : index
    %20 = vector.load %arg8[%c9, %c0_17] : memref<26x128xbf16, #tpu.memory_space<vmem>>, vector<16x128xbf16>
    %c3 = arith.constant 3 : index
    %c0_18 = arith.constant 0 : index
    %c0_19 = arith.constant 0 : index
    %21 = vector.load %arg2[%c3, %c0_18, %c0_19] : memref<5x128x512xbf16, #tpu.memory_space<vmem>>, vector<1x128x512xbf16>
    %22 = vector.shape_cast %21 : vector<1x128x512xbf16> to vector<128x512xbf16>
    %cst_20 = arith.constant dense<0.000000e+00> : vector<16x512xf32>
    %23 = tpu.matmul %20, %22, %cst_20 {dimension_numbers = #tpu.dot_dimension_numbers<[1], [0], [0], [1], [0, 0, 1, 1], [], []>} : vector<16x128xbf16>, vector<128x512xbf16>, vector<16x512xf32> -> vector<16x512xf32>
    %24 = arith.addf %19, %23 : vector<16x512xf32>
    %c10 = arith.constant 10 : index
    %c0_21 = arith.constant 0 : index
    %25 = vector.load %arg8[%c10, %c0_21] : memref<26x128xbf16, #tpu.memory_space<vmem>>, vector<16x128xbf16>
    %c4 = arith.constant 4 : index
    %c0_22 = arith.constant 0 : index
    %c0_23 = arith.constant 0 : index
    %26 = vector.load %arg2[%c4, %c0_22, %c0_23] : memref<5x128x512xbf16, #tpu.memory_space<vmem>>, vector<1x128x512xbf16>
    %27 = vector.shape_cast %26 : vector<1x128x512xbf16> to vector<128x512xbf16>
    %cst_24 = arith.constant dense<0.000000e+00> : vector<16x512xf32>
    %28 = tpu.matmul %25, %27, %cst_24 {dimension_numbers = #tpu.dot_dimension_numbers<[1], [0], [0], [1], [0, 0, 1, 1], [], []>} : vector<16x128xbf16>, vector<128x512xbf16>, vector<16x512xf32> -> vector<16x512xf32>
    %29 = arith.addf %24, %28 : vector<16x512xf32>
    %30 = arith.truncf %29 : vector<16x512xf32> to vector<16x512xbf16>
    %c0_25 = arith.constant 0 : index
    %c0_26 = arith.constant 0 : index
    %c0_27 = arith.constant 0 : index
    %31 = vector.load %arg5[%c0_25, %c0_26, %c0_27] : memref<1x16x512xbf16, #tpu.memory_space<vmem>>, vector<1x16x512xbf16>
    %32 = vector.shape_cast %31 : vector<1x16x512xbf16> to vector<16x512xbf16>
    %33 = vector.shape_cast %30 : vector<16x512xbf16> to vector<1x16x512xbf16>
    tpu.vector_store %arg5[%c0_25, %c0_26, %c0_27], %33 {strides = array<i32>} : memref<1x16x512xbf16, #tpu.memory_space<vmem>>, vector<1x16x512xbf16>,
    %c0_28 = arith.constant 0 : index
    %c0_29 = arith.constant 0 : index
    %34 = vector.load %arg6[%c0_28, %c0_29] : memref<1x512xf32, #tpu.memory_space<vmem>>, vector<1x512xf32>
    %cst_30 = arith.constant dense<0.000000e+00> : vector<512xf32>
    %35 = vector.multi_reduction <add>, %29, %cst_30 [0] : vector<16x512xf32> to vector<512xf32>
    %36 = vector.shape_cast %35 : vector<512xf32> to vector<1x512xf32>
    %37 = arith.addf %34, %36 : vector<1x512xf32>
    %c0_31 = arith.constant 0 : index
    %c0_32 = arith.constant 0 : index
    %38 = vector.load %arg6[%c0_31, %c0_32] : memref<1x512xf32, #tpu.memory_space<vmem>>, vector<1x512xf32>
    tpu.vector_store %arg6[%c0_31, %c0_32], %37 {strides = array<i32>} : memref<1x512xf32, #tpu.memory_space<vmem>>, vector<1x512xf32>,
    %c0_33 = arith.constant 0 : index
    %c0_34 = arith.constant 0 : index
    %39 = vector.load %arg7[%c0_33, %c0_34] : memref<1x512xf32, #tpu.memory_space<vmem>>, vector<1x512xf32>
    %40 = arith.mulf %29, %29 : vector<16x512xf32>
    %cst_35 = arith.constant dense<0.000000e+00> : vector<512xf32>
    %41 = vector.multi_reduction <add>, %40, %cst_35 [0] : vector<16x512xf32> to vector<512xf32>
    %42 = vector.shape_cast %41 : vector<512xf32> to vector<1x512xf32>
    %43 = arith.addf %39, %42 : vector<1x512xf32>
    %c0_36 = arith.constant 0 : index
    %c0_37 = arith.constant 0 : index
    %44 = vector.load %arg7[%c0_36, %c0_37] : memref<1x512xf32, #tpu.memory_space<vmem>>, vector<1x512xf32>
    tpu.vector_store %arg7[%c0_36, %c0_37], %43 {strides = array<i32>} : memref<1x512xf32, #tpu.memory_space<vmem>>, vector<1x512xf32>,
    %c1_i32 = arith.constant 1 : i32
    %45 = arith.cmpi eq, %arg0, %c1_i32 : i32
    %46 = arith.extui %45 : i1 to i32
    %c0_i32_38 = arith.constant 0 : i32
    %47 = arith.cmpi ne, %46, %c0_i32_38 : i32
    scf.if %47 {
      %c0_39 = arith.constant 0 : index
      %c0_40 = arith.constant 0 : index
      %48 = vector.load %arg6[%c0_39, %c0_40] : memref<1x512xf32, #tpu.memory_space<vmem>>, vector<1x512xf32>
      %cst_41 = arith.constant 3.125000e-02 : f32
      %49 = vector.broadcast %cst_41 : f32 to vector<1x512xf32>
      %50 = arith.mulf %48, %49 : vector<1x512xf32>
      %c0_42 = arith.constant 0 : index
      %c0_43 = arith.constant 0 : index
      %51 = vector.load %arg7[%c0_42, %c0_43] : memref<1x512xf32, #tpu.memory_space<vmem>>, vector<1x512xf32>
      %cst_44 = arith.constant 3.125000e-02 : f32
      %52 = vector.broadcast %cst_44 : f32 to vector<1x512xf32>
      %53 = arith.mulf %51, %52 : vector<1x512xf32>
      %54 = arith.mulf %50, %50 : vector<1x512xf32>
      %55 = arith.subf %53, %54 : vector<1x512xf32>
      %cst_45 = arith.constant 0.000000e+00 : f32
      %56 = vector.broadcast %cst_45 : f32 to vector<1x512xf32>
      %57 = arith.maximumf %55, %56 : vector<1x512xf32>
      %cst_46 = arith.constant 9.99999974E-6 : f32
      %58 = vector.broadcast %cst_46 : f32 to vector<1x512xf32>
      %59 = arith.addf %57, %58 : vector<1x512xf32>
      %60 = math.rsqrt %59 : vector<1x512xf32>
      %c0_47 = arith.constant 0 : index
      %c0_48 = arith.constant 0 : index
      %61 = vector.load %arg3[%c0_47, %c0_48] : memref<1x512xf32, #tpu.memory_space<vmem>>, vector<1x512xf32>
      %62 = arith.mulf %60, %61 : vector<1x512xf32>
      %c0_49 = arith.constant 0 : index
      %c0_50 = arith.constant 0 : index
      %63 = vector.load %arg6[%c0_49, %c0_50] : memref<1x512xf32, #tpu.memory_space<vmem>>, vector<1x512xf32>
      tpu.vector_store %arg6[%c0_49, %c0_50], %62 {strides = array<i32>} : memref<1x512xf32, #tpu.memory_space<vmem>>, vector<1x512xf32>,
      %c0_51 = arith.constant 0 : index
      %c0_52 = arith.constant 0 : index
      %64 = vector.load %arg4[%c0_51, %c0_52] : memref<1x512xf32, #tpu.memory_space<vmem>>, vector<1x512xf32>
      %65 = arith.mulf %50, %62 : vector<1x512xf32>
      %66 = arith.subf %64, %65 : vector<1x512xf32>
      %c0_53 = arith.constant 0 : index
      %c0_54 = arith.constant 0 : index
      %67 = vector.load %arg7[%c0_53, %c0_54] : memref<1x512xf32, #tpu.memory_space<vmem>>, vector<1x512xf32>
      tpu.vector_store %arg7[%c0_53, %c0_54], %66 {strides = array<i32>} : memref<1x512xf32, #tpu.memory_space<vmem>>, vector<1x512xf32>,
    } else {
    }
    return
  }
  func.func @transform_0(%arg0: i32) -> (i32, i32, i32) {
    %c0_i32 = arith.constant 0 : i32
    %c0_i32_0 = arith.constant 0 : i32
    %c0_i32_1 = arith.constant 0 : i32
    return %arg0, %c0_i32, %c0_i32_0 : i32, i32, i32
  }
  func.func @transform_1(%arg0: i32) -> (i32, i32, i32) {
    %c0_i32 = arith.constant 0 : i32
    %c0_i32_0 = arith.constant 0 : i32
    %c0_i32_1 = arith.constant 0 : i32
    %c0_i32_2 = arith.constant 0 : i32
    return %c0_i32, %c0_i32_0, %c0_i32_1 : i32, i32, i32
  }
  func.func @transform_2(%arg0: i32) -> (i32, i32) {
    %c0_i32 = arith.constant 0 : i32
    %c0_i32_0 = arith.constant 0 : i32
    %c0_i32_1 = arith.constant 0 : i32
    return %c0_i32, %c0_i32_0 : i32, i32
  }
  func.func @transform_3(%arg0: i32) -> (i32, i32) {
    %c0_i32 = arith.constant 0 : i32
    %c0_i32_0 = arith.constant 0 : i32
    %c0_i32_1 = arith.constant 0 : i32
    return %c0_i32, %c0_i32_0 : i32, i32
  }
  func.func @transform_4(%arg0: i32) -> (i32, i32, i32) {
    %c0_i32 = arith.constant 0 : i32
    %c0_i32_0 = arith.constant 0 : i32
    %c0_i32_1 = arith.constant 0 : i32
    return %arg0, %c0_i32, %c0_i32_0 : i32, i32, i32
  }
  func.func @transform_5(%arg0: i32) -> (i32, i32) {
    %c0_i32 = arith.constant 0 : i32
    %c0_i32_0 = arith.constant 0 : i32
    %c0_i32_1 = arith.constant 0 : i32
    return %c0_i32, %c0_i32_0 : i32, i32
  }
  func.func @transform_6(%arg0: i32) -> (i32, i32) {
    %c0_i32 = arith.constant 0 : i32
    %c0_i32_0 = arith.constant 0 : i32
    %c0_i32_1 = arith.constant 0 : i32
    return %c0_i32, %c0_i32_0 : i32, i32
  }
}

</mosaic_0001>

<llo_original>
// kernel: tpu_custom_call.1
$region0: #{tpu_custom_call.1}
  #allocation0 [shape = 'u32[]', space=smem, size = 0x4, offset = 0x4, fixed_abs, tag = 'smem constant byte address 0x4 - core index']
  #allocation1 [shape = 'u32[72,128]{1,0:T(1,128)}', space=vmem, size = 0x9000, scoped, tag = 'internal scratch']
  #allocation2 [shape = 'bf16[26,128]{1,0:T(8,128)(2,1)}', space=vmem, size = 0x2000, scoped, tag = 'scratch operand']
  %s0 = inlined_call_operand.hbm [shape: bf16[2,16,128], index: 0, kind: input, shape index: {}]
  %s1 = inlined_call_operand.hbm [shape: bf16[5,128,512], index: 1, kind: input, shape index: {}]
  %s2 = inlined_call_operand.hbm [shape: f32[1,512], index: 2, kind: input, shape index: {}]
  %s3 = inlined_call_operand.hbm [shape: f32[1,512], index: 3, kind: input, shape index: {}]
  %s4 = inlined_call_operand.hbm [shape: bf16[2,16,512], index: 4, kind: output, shape index: {0}]
  %s5 = inlined_call_operand.hbm [shape: f32[1,512], index: 5, kind: output, shape index: {1}]
  %s6 = inlined_call_operand.hbm [shape: f32[1,512], index: 6, kind: output, shape index: {2}]
  %7 = xla_tuple %s4, %s5, %s6
  %s8 = sld [smem:[#allocation0]]
  $region89: #{tpu_custom_call.1} parent=0
    _
  %s10 = ssub.s32 1, %s8
  %s11 = scalar_select 0, %s10, %s8
  $region1: #{tpu_custom_call.1} parent=0
    #allocation3 [shape = 'u8[8192]{0}', space=vmem, size = 0x2000, scoped, tag = 'input window, operand 0']
    #allocation4 [shape = 's32[2]{0}', space=sflag, size = 0x8, scoped, tag = 'scoped memory for tpu_custom_call.1']
    #allocation5 [shape = 's32[2]{0}', space=sflag, size = 0x8, scoped, tag = 'scoped memory for tpu_custom_call.1']
    #allocation6 [shape = 'u8[655360]{0}', space=vmem, size = 0xa0000, scoped, tag = 'input window, operand 1, single buffered']
    #allocation7 [shape = 's32[1]{0}', space=sflag, size = 0x4, scoped, tag = 'scoped memory for tpu_custom_call.1']
    #allocation8 [shape = 'u8[2048]{0}', space=vmem, size = 0x800, scoped, tag = 'input window, operand 2, single buffered']
    #allocation9 [shape = 'u8[2048]{0}', space=vmem, size = 0x800, scoped, tag = 'input window, operand 3, single buffered']
    #allocation10 [shape = 's32[1]{0}', space=sflag, size = 0x4, scoped, tag = 'scoped memory for tpu_custom_call.1']
    #allocation11 [shape = 'u8[32768]{0}', space=vmem, size = 0x8000, scoped, tag = 'output window, operand 0']
    #allocation12 [shape = 'u8[2048]{0}', space=vmem, size = 0x800, scoped, tag = 'output window, operand 1, single buffered']
    #allocation13 [shape = 's32[1]{0}', space=sflag, size = 0x4, scoped, tag = 'scoped memory for tpu_custom_call.1']
    #allocation14 [shape = 'u8[2048]{0}', space=vmem, size = 0x800, scoped, tag = 'output window, operand 2, single buffered']
    %12 = vsyncpa [#allocation4], 0
    %s13 = scalar_lea.sflag [#allocation4], 1
    %14 = vsyncpa %s13, 0
    %15 = vsyncpa [#allocation7], 0
    %16 = vsyncpa [#allocation10], 0
    %17 = vsyncpa [#allocation5], 0
    %s18 = scalar_lea.sflag [#allocation5], 1
    %19 = vsyncpa %s18, 0
    %20 = vsyncpa [#allocation13], 0
    loop: start=0, step=1, limit=4
    $region2: #{tpu_custom_call.1} parent=1 // loop_pre_header
      _
    $region3: #{tpu_custom_call.1} parent=1 // loop_header
      %s22 = sphi 0, %s26
      %p23 = scmp.ge.s32.totalorder %s22, 4
      %s32 = sphi 0, %s34
      %s35 = sphi 0, %s32
      %s36 = sphi 0, %s35
      %s52 = sphi 0, %s36
      %s56 = sphi 0, %s56
      %s58 = sphi 0, %s56
      %s59 = sphi 0, %s58
      %s73 = sphi 0, %s59
      %s77 = sphi 0, %s77
      %s79 = sphi 0, %s77
      %s80 = sphi 0, %s79
      %s94 = sphi 0, %s80
      %s98 = sphi 0, %s98
      %s100 = sphi 0, %s98
      %s101 = sphi 0, %s100
      %s115 = sphi 0, %s101
      %s121 = sphi 0, %s123
      %s124 = sphi 0, %s121
      %s125 = sphi 0, %s124
      %s141 = sphi 0, %s125
      %s145 = sphi 0, %s145
      %s147 = sphi 0, %s145
      %s148 = sphi 0, %s147
      %s162 = sphi 0, %s148
      %s166 = sphi 0, %s166
      %s168 = sphi 0, %s166
      %s169 = sphi 0, %s168
      %s183 = sphi 0, %s169
    $region4: #{tpu_custom_call.1} parent=1 // loop_header_branch
      %25 = sbr.rel (%p23) target = $region8
    $region5: #{tpu_custom_call.1} parent=1 // loop_body
      %s27 = ssub.s32 %s22, 1
      %s28 = ssub.s32 %s22, 2
      %s29 = sadd.s32 %s22, 1
      %s30 = ssub.s32 %s22, %s29
      %p31 = scmp.eq.s32.totalorder %s30, 0
      %s33 = sadd.s32 %s32, 1
      %s34 = scalar_select %p31, %s32, %s33
      %p37 = pneg %p31
      %p38 = scmp.eq.s32.totalorder %s22, 1
      %p39 = por %p37, %p38
      %p40 = scmp.ne.s32.totalorder %s32, %s35
      %p41 = scmp.eq.s32.totalorder %s22, 0
      %p42 = por %p40, %p41
      %p43 = scmp.ne.s32.totalorder %s32, %s35
      %p44 = scmp.eq.s32.totalorder %s27, 1
      %p45 = por %p43, %p44
      %p46 = scmp.ne.s32.totalorder %s35, %s36
      %p47 = scmp.eq.s32.totalorder %s27, 0
      %p48 = por %p46, %p47
      %p49 = scmp.ne.s32.totalorder %s35, %s36
      %p50 = scmp.eq.s32.totalorder %s28, 1
      %p51 = por %p49, %p50
      %p53 = scmp.ne.s32.totalorder %s36, %s52
      %p54 = scmp.eq.s32.totalorder %s28, 0
      %p55 = por %p53, %p54
      %s57 = sadd.s32 %s56, 1
      %p60 = scmp.eq.s32.totalorder %s22, 1
      %p61 = scmp.ne.s32.totalorder %s56, %s58
      %p62 = scmp.eq.s32.totalorder %s22, 0
      %p63 = por %p61, %p62
      %p64 = scmp.ne.s32.totalorder %s56, %s58
      %p65 = scmp.eq.s32.totalorder %s27, 1
      %p66 = por %p64, %p65
      %p67 = scmp.ne.s32.totalorder %s58, %s59
      %p68 = scmp.eq.s32.totalorder %s27, 0
      %p69 = por %p67, %p68
      %p70 = scmp.ne.s32.totalorder %s58, %s59
      %p71 = scmp.eq.s32.totalorder %s28, 1
      %p72 = por %p70, %p71
      %p74 = scmp.ne.s32.totalorder %s59, %s73
      %p75 = scmp.eq.s32.totalorder %s28, 0
      %p76 = por %p74, %p75
      %s78 = sadd.s32 %s77, 1
      %p81 = scmp.eq.s32.totalorder %s22, 1
      %p82 = scmp.ne.s32.totalorder %s77, %s79
      %p83 = scmp.eq.s32.totalorder %s22, 0
      %p84 = por %p82, %p83
      %p85 = scmp.ne.s32.totalorder %s77, %s79
      %p86 = scmp.eq.s32.totalorder %s27, 1
      %p87 = por %p85, %p86
      %p88 = scmp.ne.s32.totalorder %s79, %s80
      %p89 = scmp.eq.s32.totalorder %s27, 0
      %p90 = por %p88, %p89
      %p91 = scmp.ne.s32.totalorder %s79, %s80
      %p92 = scmp.eq.s32.totalorder %s28, 1
      %p93 = por %p91, %p92
      %p95 = scmp.ne.s32.totalorder %s80, %s94
      %p96 = scmp.eq.s32.totalorder %s28, 0
      %p97 = por %p95, %p96
      %s99 = sadd.s32 %s98, 1
      %p102 = scmp.eq.s32.totalorder %s22, 1
      %p103 = scmp.ne.s32.totalorder %s98, %s100
      %p104 = scmp.eq.s32.totalorder %s22, 0
      %p105 = por %p103, %p104
      %p106 = scmp.ne.s32.totalorder %s98, %s100
      %p107 = scmp.eq.s32.totalorder %s27, 1
      %p108 = por %p106, %p107
      %p109 = scmp.ne.s32.totalorder %s100, %s101
      %p110 = scmp.eq.s32.totalorder %s27, 0
      %p111 = por %p109, %p110
      %p112 = scmp.ne.s32.totalorder %s100, %s101
      %p113 = scmp.eq.s32.totalorder %s28, 1
      %p114 = por %p112, %p113
      %p116 = scmp.ne.s32.totalorder %s101, %s115
      %p117 = scmp.eq.s32.totalorder %s28, 0
      %p118 = por %p116, %p117
      %s119 = ssub.s32 %s22, %s29
      %p120 = scmp.eq.s32.totalorder %s119, 0
      %s122 = sadd.s32 %s121, 1
      %s123 = scalar_select %p120, %s121, %s122
      %p126 = pneg %p120
      %p127 = scmp.eq.s32.totalorder %s22, 1
      %p128 = por %p126, %p127
      %p129 = scmp.ne.s32.totalorder %s121, %s124
      %p130 = scmp.eq.s32.totalorder %s22, 0
      %p131 = por %p129, %p130
      %p132 = scmp.ne.s32.totalorder %s121, %s124
      %p133 = scmp.eq.s32.totalorder %s27, 1
      %p134 = por %p132, %p133
      %p135 = scmp.ne.s32.totalorder %s124, %s125
      %p136 = scmp.eq.s32.totalorder %s27, 0
      %p137 = por %p135, %p136
      %p138 = scmp.ne.s32.totalorder %s124, %s125
      %p139 = scmp.eq.s32.totalorder %s28, 1
      %p140 = por %p138, %p139
      %p142 = scmp.ne.s32.totalorder %s125, %s141
      %p143 = scmp.eq.s32.totalorder %s28, 0
      %p144 = por %p142, %p143
      %s146 = sadd.s32 %s145, 1
      %p149 = scmp.eq.s32.totalorder %s22, 1
      %p150 = scmp.ne.s32.totalorder %s145, %s147
      %p151 = scmp.eq.s32.totalorder %s22, 0
      %p152 = por %p150, %p151
      %p153 = scmp.ne.s32.totalorder %s145, %s147
      %p154 = scmp.eq.s32.totalorder %s27, 1
      %p155 = por %p153, %p154
      %p156 = scmp.ne.s32.totalorder %s147, %s148
      %p157 = scmp.eq.s32.totalorder %s27, 0
      %p158 = por %p156, %p157
      %p159 = scmp.ne.s32.totalorder %s147, %s148
      %p160 = scmp.eq.s32.totalorder %s28, 1
      %p161 = por %p159, %p160
      %p163 = scmp.ne.s32.totalorder %s148, %s162
      %p164 = scmp.eq.s32.totalorder %s28, 0
      %p165 = por %p163, %p164
      %s167 = sadd.s32 %s166, 1
      %p170 = scmp.eq.s32.totalorder %s22, 1
      %p171 = scmp.ne.s32.totalorder %s166, %s168
      %p172 = scmp.eq.s32.totalorder %s22, 0
      %p173 = por %p171, %p172
      %p174 = scmp.ne.s32.totalorder %s166, %s168
      %p175 = scmp.eq.s32.totalorder %s27, 1
      %p176 = por %p174, %p175
      %p177 = scmp.ne.s32.totalorder %s168, %s169
      %p178 = scmp.eq.s32.totalorder %s27, 0
      %p179 = por %p177, %p178
      %p180 = scmp.ne.s32.totalorder %s168, %s169
      %p181 = scmp.eq.s32.totalorder %s28, 1
      %p182 = por %p180, %p181
      %p184 = scmp.ne.s32.totalorder %s169, %s183
      %p185 = scmp.eq.s32.totalorder %s28, 0
      %p186 = por %p184, %p185
      %p187 = scmp.le.s32.totalorder 1, %s22
      %p188 = scmp.lt.s32.totalorder %s22, 3
      %p189 = pnand %p187, %p188
      %p190 = pneg %p189
      // Predicated region
      $region9: #{tpu_custom_call.1} parent=5 // pred_check
        _
      $region10: #{tpu_custom_call.1} parent=5 // pred_check_branch
        %192 = sbr.rel (%p189) target = $region12
      $region11: #{tpu_custom_call.1} parent=5 // pred_region
        %s193 = ssub.s32 %s22, 1
        // Predicated region
        $region13: #{tpu_custom_call.1} parent=11 // pred_check
          %p194 = pneg %p69
        $region14: #{tpu_custom_call.1} parent=11 // pred_check_branch
          %196 = sbr.rel (%p194) target = $region16
        $region15: #{tpu_custom_call.1} parent=11 // pred_region
          %198 = vsyncadd [#allocation7], 0
          %s199 = sshll.u32 %s1, 4
          %s200 = int_to_ptr.hbm [resolvable:$true] %s199
          %s201 = sshll.u32 [#allocation6], 4
          %s202 = int_to_ptr.vmem [resolvable:$true] %s201
          %207 = dma.hbm_to_vmem [thread:$0]  %s200, 20480, %s202, [#allocation7], 256, 256, 16
        $region16: #{tpu_custom_call.1} parent=11 // pred_fallthru
          _
        // Predicated region
        $region17: #{tpu_custom_call.1} parent=11 // pred_check
          %p208 = pneg %p90
        $region18: #{tpu_custom_call.1} parent=11 // pred_check_branch
          %210 = sbr.rel (%p208) target = $region20
        $region19: #{tpu_custom_call.1} parent=11 // pred_region
          %212 = vsyncadd [#allocation7], 0
          %s214 = sshll.u32 %s2, 4
          %s215 = int_to_ptr.hbm [resolvable:$true] %s214
          %s216 = sshll.u32 [#allocation8], 4
          %s217 = int_to_ptr.vmem [resolvable:$true] %s216
          %219 = dma.hbm_to_vmem [thread:$0]  %s215, 64, %s217, [#allocation7]
        $region20: #{tpu_custom_call.1} parent=11 // pred_fallthru
          _
        // Predicated region
        $region21: #{tpu_custom_call.1} parent=11 // pred_check
          %p220 = pneg %p111
        $region22: #{tpu_custom_call.1} parent=11 // pred_check_branch
          %222 = sbr.rel (%p220) target = $region24
        $region23: #{tpu_custom_call.1} parent=11 // pred_region
          %224 = vsyncadd [#allocation10], 0
          %s226 = sshll.u32 %s3, 4
          %s227 = int_to_ptr.hbm [resolvable:$true] %s226
          %s228 = sshll.u32 [#allocation9], 4
          %s229 = int_to_ptr.vmem [resolvable:$true] %s228
          %231 = dma.hbm_to_vmem [thread:$0]  %s227, 64, %s229, [#allocation10]
        $region24: #{tpu_custom_call.1} parent=11 // pred_fallthru
          _
      $region12: #{tpu_custom_call.1} parent=5 // pred_fallthru
        _
      %p232 = scmp.lt.s32.totalorder %s22, 2
      // Predicated region
      $region25: #{tpu_custom_call.1} parent=5 // pred_check
        %p233 = pneg %p232
      $region26: #{tpu_custom_call.1} parent=5 // pred_check_branch
        %235 = sbr.rel (%p233) target = $region28
      $region27: #{tpu_custom_call.1} parent=5 // pred_region
        // Predicated region
        $region29: #{tpu_custom_call.1} parent=27 // pred_check
          %p236 = pneg %p42
        $region30: #{tpu_custom_call.1} parent=27 // pred_check_branch
          %238 = sbr.rel (%p236) target = $region32
        $region31: #{tpu_custom_call.1} parent=27 // pred_region
          %s239 = sand.u32 %s32, 1
          %s240 = scalar_lea.sflag [#allocation4], %s239
          %s241 = sand.u32 %s32, 1
          %s242 = smul.addr %s241, 8
          %s243 = scalar_lea.vmem [#allocation3], %s242
          %245 = vsyncadd %s240, 0
          %s246 = smul.addr %s22, 2
          %s247 = smul.addr %s246, 4
          %s248 = scalar_lea.hbm %s0, %s247
          %s249 = sshll.u32 %s248, 4
          %s250 = int_to_ptr.hbm [resolvable:$true] %s249
          %s251 = sshll.u32 %s243, 4
          %s252 = int_to_ptr.vmem [resolvable:$true] %s251
          %257 = dma.hbm_to_vmem [thread:$0]  %s250, 128, %s252, %s240, 64, 64, 4
        $region32: #{tpu_custom_call.1} parent=27 // pred_fallthru
          _
      $region28: #{tpu_custom_call.1} parent=5 // pred_fallthru
        _
      %p258 = scmp.le.s32.totalorder 1, %s22
      %p259 = scmp.lt.s32.totalorder %s22, 3
      %p260 = pnand %p258, %p259
      %p261 = pneg %p260
      // Predicated region
      $region33: #{tpu_custom_call.1} parent=5 // pred_check
        _
      $region34: #{tpu_custom_call.1} parent=5 // pred_check_branch
        %263 = sbr.rel (%p260) target = $region36
      $region35: #{tpu_custom_call.1} parent=5 // pred_region
        %s264 = ssub.s32 %s22, 1
        %s265 = sand.u32 %s35, 1
        %s266 = scalar_lea.sflag [#allocation4], %s265
        %s267 = sand.u32 %s35, 1
        %s268 = smul.addr %s267, 8
        %s269 = scalar_lea.vmem [#allocation3], %s268
        // Predicated region
        $region37: #{tpu_custom_call.1} parent=35 // pred_check
          %p270 = pneg %p48
        $region38: #{tpu_custom_call.1} parent=35 // pred_check_branch
          %272 = sbr.rel (%p270) target = $region40
        $region39: #{tpu_custom_call.1} parent=35 // pred_region
          %274 = dma.done %s266, 128
        $region40: #{tpu_custom_call.1} parent=35 // pred_fallthru
          _
        // Predicated region
        $region41: #{tpu_custom_call.1} parent=35 // pred_check
          %p275 = pneg %p69
        $region42: #{tpu_custom_call.1} parent=35 // pred_check_branch
          %277 = sbr.rel (%p275) target = $region44
        $region43: #{tpu_custom_call.1} parent=35 // pred_region
          %279 = dma.done [#allocation7], 20480
        $region44: #{tpu_custom_call.1} parent=35 // pred_fallthru
          _
        // Predicated region
        $region45: #{tpu_custom_call.1} parent=35 // pred_check
          %p280 = pneg %p90
        $region46: #{tpu_custom_call.1} parent=35 // pred_check_branch
          %282 = sbr.rel (%p280) target = $region48
        $region47: #{tpu_custom_call.1} parent=35 // pred_region
          %284 = dma.done [#allocation7], 64
        $region48: #{tpu_custom_call.1} parent=35 // pred_fallthru
          _
        // Predicated region
        $region49: #{tpu_custom_call.1} parent=35 // pred_check
          %p285 = pneg %p111
        $region50: #{tpu_custom_call.1} parent=35 // pred_check_branch
          %287 = sbr.rel (%p285) target = $region52
        $region51: #{tpu_custom_call.1} parent=35 // pred_region
          %289 = dma.done [#allocation10], 64
        $region52: #{tpu_custom_call.1} parent=35 // pred_fallthru
          _
        %s290 = sand.u32 %s35, 1
        %s291 = scalar_lea.sflag [#allocation4], %s290
        %s292 = sand.u32 %s35, 1
        %s293 = smul.addr %s292, 8
        %s294 = scalar_lea.vmem [#allocation3], %s293
        %p295 = pneg %p48
        %p296 = pneg %p45
        %p297 = pneg %p69
        %p298 = pneg %p66
        %p299 = pneg %p90
        %p300 = pneg %p87
        %p301 = pneg %p111
        %p302 = pneg %p108
        %p303 = pneg %p137
        %p304 = pneg %p134
        %s305 = sand.u32 %s124, 1
        %s306 = scalar_lea.sflag [#allocation5], %s305
        %s307 = sand.u32 %s124, 1
        %s308 = smul.addr %s307, 32
        %s309 = scalar_lea.vmem [#allocation11], %s308
        %p310 = pneg %p158
        %p311 = pneg %p155
        %p312 = pneg %p179
        %p313 = pneg %p176
        %p315 = scmp.eq.s32.totalorder %s27, 0
        // Predicated region
        $region53: #{tpu_custom_call.1} parent=35 // pred_check
          %p316 = pneg %p315
        $region54: #{tpu_custom_call.1} parent=35 // pred_check_branch
          %318 = sbr.rel (%p316) target = $region56
        $region55: #{tpu_custom_call.1} parent=35 // pred_region
          %319 = vst [vmem:[#allocation2] sm:$0xf] 0
          %320 = vst [vmem:[#allocation2 + $0x4] sm:$0xf] 0
          %321 = vst [vmem:[#allocation2 + $0x8] sm:$0xf] 0
          %322 = vst [vmem:[#allocation2 + $0xc] sm:$0x1] 0
          %v323 = vlaneseq
          %vm324 = vcmp.ge.s32.totalorder %v323, 0
          %vm325 = vcmp.lt.s32.totalorder %v323, 512
          %vm326 = vmand %vm324, %vm325
          %327 = vst.msk [vmem:[#allocation12] sm:$0xf] %vm326, 0.0
          %328 = vst.msk [vmem:[#allocation14] sm:$0xf] %vm326, 0.0
        $region56: #{tpu_custom_call.1} parent=35 // pred_fallthru
          _
        %v329 = vld [vmem:[%s269] sm:$0xf]
        %v330 = vld [vmem:[%s269 + $0x4] sm:$0xf]
        %331 = vst [vmem:[#allocation2 + $0x4] sm:$0xf] %v329
        %332 = vst [vmem:[#allocation2 + $0x8] sm:$0xf] %v330
        %v333 = vld [vmem:[#allocation2] sm:$0x8]
        %v334 = vld [vmem:[#allocation2 + $0x4] sm:$0xf]
        %v335 = vld [vmem:[#allocation2 + $0x8] sm:$0x7]
        %v336 = vld [vmem:[#allocation6] sm:$0xff]
        %v337 = vld [vmem:[#allocation6 + $0x8] sm:$0xff]
        %v338 = vld [vmem:[#allocation6 + $0x10] sm:$0xff]
        %v339 = vld [vmem:[#allocation6 + $0x18] sm:$0xff]
        %v340 = vld [vmem:[#allocation6 + $0x20] sm:$0xff]
        %v341 = vld [vmem:[#allocation6 + $0x28] sm:$0xff]
        %v342 = vld [vmem:[#allocation6 + $0x30] sm:$0xff]
        %v343 = vld [vmem:[#allocation6 + $0x38] sm:$0xff]
        %v344 = vld [vmem:[#allocation6 + $0x40] sm:$0xff]
        %v345 = vld [vmem:[#allocation6 + $0x48] sm:$0xff]
        %v346 = vld [vmem:[#allocation6 + $0x50] sm:$0xff]
        %v347 = vld [vmem:[#allocation6 + $0x58] sm:$0xff]
        %v348 = vld [vmem:[#allocation6 + $0x60] sm:$0xff]
        %v349 = vld [vmem:[#allocation6 + $0x68] sm:$0xff]
        %v350 = vld [vmem:[#allocation6 + $0x70] sm:$0xff]
        %v351 = vld [vmem:[#allocation6 + $0x78] sm:$0xff]
        %v352 = vld [vmem:[#allocation6 + $0x80] sm:$0xff]
        %v353 = vld [vmem:[#allocation6 + $0x88] sm:$0xff]
        %v354 = vld [vmem:[#allocation6 + $0x90] sm:$0xff]
        %v355 = vld [vmem:[#allocation6 + $0x98] sm:$0xff]
        %v356 = vld [vmem:[#allocation6 + $0xa0] sm:$0xff]
        %v357 = vld [vmem:[#allocation6 + $0xa8] sm:$0xff]
        %v358 = vld [vmem:[#allocation6 + $0xb0] sm:$0xff]
        %v359 = vld [vmem:[#allocation6 + $0xb8] sm:$0xff]
        %v360 = vld [vmem:[#allocation6 + $0xc0] sm:$0xff]
        %v361 = vld [vmem:[#allocation6 + $0xc8] sm:$0xff]
        %v362 = vld [vmem:[#allocation6 + $0xd0] sm:$0xff]
        %v363 = vld [vmem:[#allocation6 + $0xd8] sm:$0xff]
        %v364 = vld [vmem:[#allocation6 + $0xe0] sm:$0xff]
        %v365 = vld [vmem:[#allocation6 + $0xe8] sm:$0xff]
        %v366 = vld [vmem:[#allocation6 + $0xf0] sm:$0xff]
        %v367 = vld [vmem:[#allocation6 + $0xf8] sm:$0xff]
        %v368 = vld [vmem:[#allocation2 + $0x8] sm:$0xf]
        %s369 = scalar_lea.vmem [#allocation6], 256
        %v370 = vld [vmem:[%s369] sm:$0xff]
        %v371 = vld [vmem:[%s369 + $0x8] sm:$0xff]
        %v372 = vld [vmem:[%s369 + $0x10] sm:$0xff]
        %v373 = vld [vmem:[%s369 + $0x18] sm:$0xff]
        %v374 = vld [vmem:[%s369 + $0x20] sm:$0xff]
        %v375 = vld [vmem:[%s369 + $0x28] sm:$0xff]
        %v376 = vld [vmem:[%s369 + $0x30] sm:$0xff]
        %v377 = vld [vmem:[%s369 + $0x38] sm:$0xff]
        %v378 = vld [vmem:[%s369 + $0x40] sm:$0xff]
        %v379 = vld [vmem:[%s369 + $0x48] sm:$0xff]
        %v380 = vld [vmem:[%s369 + $0x50] sm:$0xff]
        %v381 = vld [vmem:[%s369 + $0x58] sm:$0xff]
        %v382 = vld [vmem:[%s369 + $0x60] sm:$0xff]
        %v383 = vld [vmem:[%s369 + $0x68] sm:$0xff]
        %v384 = vld [vmem:[%s369 + $0x70] sm:$0xff]
        %v385 = vld [vmem:[%s369 + $0x78] sm:$0xff]
        %v386 = vld [vmem:[%s369 + $0x80] sm:$0xff]
        %v387 = vld [vmem:[%s369 + $0x88] sm:$0xff]
        %v388 = vld [vmem:[%s369 + $0x90] sm:$0xff]
        %v389 = vld [vmem:[%s369 + $0x98] sm:$0xff]
        %v390 = vld [vmem:[%s369 + $0xa0] sm:$0xff]
        %v391 = vld [vmem:[%s369 + $0xa8] sm:$0xff]
        %v392 = vld [vmem:[%s369 + $0xb0] sm:$0xff]
        %v393 = vld [vmem:[%s369 + $0xb8] sm:$0xff]
        %v394 = vld [vmem:[%s369 + $0xc0] sm:$0xff]
        %v395 = vld [vmem:[%s369 + $0xc8] sm:$0xff]
        %v396 = vld [vmem:[%s369 + $0xd0] sm:$0xff]
        %v397 = vld [vmem:[%s369 + $0xd8] sm:$0xff]
        %v398 = vld [vmem:[%s369 + $0xe0] sm:$0xff]
        %v399 = vld [vmem:[%s369 + $0xe8] sm:$0xff]
        %v400 = vld [vmem:[%s369 + $0xf0] sm:$0xff]
        %v401 = vld [vmem:[%s369 + $0xf8] sm:$0xff]
        %v405 = vunpack.c.l.b16 %v333
        %v406 = vunpack.c.l.b16 %v334
        %v407 = vunpack.c.l.b16 %v368
        %v408 = vpack.c.b16 %v406, %v405
        %v409 = vpack.c.b16 %v407, %v407
        %vm410 = vsmask.f32 4352
        %v412 = vshrl.u32 %v408, 16
        %v414 = vrot.slane %v412, 3
        %v415 = vshll.u32 %v408, 16
        %v417 = vrot.slane %v415, 4
        %v418 = vor.u32 %v414, %v417
        %v420 = vshrl.u32 %v409, 16
        %v422 = vrot.slane %v420, 3
        %v423 = vshll.u32 %v409, 16
        %v425 = vrot.slane %v423, 4
        %v426 = vor.u32 %v422, %v425
        %v427 = vsel %vm410, %v418, %v426
        %v461 = vunpack.c.l.b16 %v370
        %v462 = vunpack.c.h.b16 %v370
        %v463 = vunpack.c.l.b16 %v371
        %v464 = vunpack.c.h.b16 %v371
        %v465 = vunpack.c.l.b16 %v372
        %v466 = vunpack.c.h.b16 %v372
        %v467 = vunpack.c.l.b16 %v373
        %v468 = vunpack.c.h.b16 %v373
        %v469 = vunpack.c.l.b16 %v374
        %v470 = vunpack.c.h.b16 %v374
        %v471 = vunpack.c.l.b16 %v375
        %v472 = vunpack.c.h.b16 %v375
        %v473 = vunpack.c.l.b16 %v376
        %v474 = vunpack.c.h.b16 %v376
        %v475 = vunpack.c.l.b16 %v377
        %v476 = vunpack.c.h.b16 %v377
        %v477 = vunpack.c.l.b16 %v378
        %v478 = vunpack.c.h.b16 %v378
        %v479 = vunpack.c.l.b16 %v379
        %v480 = vunpack.c.h.b16 %v379
        %v481 = vunpack.c.l.b16 %v380
        %v482 = vunpack.c.h.b16 %v380
        %v483 = vunpack.c.l.b16 %v381
        %v484 = vunpack.c.h.b16 %v381
        %v485 = vunpack.c.l.b16 %v382
        %v486 = vunpack.c.h.b16 %v382
        %v487 = vunpack.c.l.b16 %v383
        %v488 = vunpack.c.h.b16 %v383
        %v489 = vunpack.c.l.b16 %v384
        %v490 = vunpack.c.h.b16 %v384
        %v491 = vunpack.c.l.b16 %v385
        %v492 = vunpack.c.h.b16 %v385
        %v493 = vunpack.c.l.b16 %v386
        %v494 = vunpack.c.h.b16 %v386
        %v495 = vunpack.c.l.b16 %v387
        %v496 = vunpack.c.h.b16 %v387
        %v497 = vunpack.c.l.b16 %v388
        %v498 = vunpack.c.h.b16 %v388
        %v499 = vunpack.c.l.b16 %v389
        %v500 = vunpack.c.h.b16 %v389
        %v501 = vunpack.c.l.b16 %v390
        %v502 = vunpack.c.h.b16 %v390
        %v503 = vunpack.c.l.b16 %v391
        %v504 = vunpack.c.h.b16 %v391
        %v505 = vunpack.c.l.b16 %v392
        %v506 = vunpack.c.h.b16 %v392
        %v507 = vunpack.c.l.b16 %v393
        %v508 = vunpack.c.h.b16 %v393
        %v509 = vunpack.c.l.b16 %v394
        %v510 = vunpack.c.h.b16 %v394
        %v511 = vunpack.c.l.b16 %v395
        %v512 = vunpack.c.h.b16 %v395
        %v513 = vunpack.c.l.b16 %v396
        %v514 = vunpack.c.h.b16 %v396
        %v515 = vunpack.c.l.b16 %v397
        %v516 = vunpack.c.h.b16 %v397
        %v517 = vunpack.c.l.b16 %v398
        %v518 = vunpack.c.h.b16 %v398
        %v519 = vunpack.c.l.b16 %v399
        %v520 = vunpack.c.h.b16 %v399
        %v521 = vunpack.c.l.b16 %v400
        %v522 = vunpack.c.h.b16 %v400
        %v523 = vunpack.c.l.b16 %v401
        %v524 = vunpack.c.h.b16 %v401
        %v525 = vpack.c.b16 %v465, %v461
        %v526 = vpack.c.b16 %v466, %v462
        %v527 = vpack.c.b16 %v467, %v463
        %v528 = vpack.c.b16 %v468, %v464
        %v529 = vpack.c.b16 %v473, %v469
        %v530 = vpack.c.b16 %v474, %v470
        %v531 = vpack.c.b16 %v475, %v471
        %v532 = vpack.c.b16 %v476, %v472
        %v533 = vpack.c.b16 %v481, %v477
        %v534 = vpack.c.b16 %v482, %v478
        %v535 = vpack.c.b16 %v483, %v479
        %v536 = vpack.c.b16 %v484, %v480
        %v537 = vpack.c.b16 %v489, %v485
        %v538 = vpack.c.b16 %v490, %v486
        %v539 = vpack.c.b16 %v491, %v487
        %v540 = vpack.c.b16 %v492, %v488
        %v541 = vpack.c.b16 %v497, %v493
        %v542 = vpack.c.b16 %v498, %v494
        %v543 = vpack.c.b16 %v499, %v495
        %v544 = vpack.c.b16 %v500, %v496
        %v545 = vpack.c.b16 %v505, %v501
        %v546 = vpack.c.b16 %v506, %v502
        %v547 = vpack.c.b16 %v507, %v503
        %v548 = vpack.c.b16 %v508, %v504
        %v549 = vpack.c.b16 %v513, %v509
        %v550 = vpack.c.b16 %v514, %v510
        %v551 = vpack.c.b16 %v515, %v511
        %v552 = vpack.c.b16 %v516, %v512
        %v553 = vpack.c.b16 %v521, %v517
        %v554 = vpack.c.b16 %v522, %v518
        %v555 = vpack.c.b16 %v523, %v519
        %v556 = vpack.c.b16 %v524, %v520
        %589 = vmatpush.bf16.msra.mxu0 %v553
        %590 = vmatpush.bf16.msra.mxu0 %v549
        %591 = vmatpush.bf16.msra.mxu0 %v545
        %592 = vmatpush.bf16.msra.mxu0 %v541
        %593 = vmatpush.bf16.msra.mxu0 %v537
        %594 = vmatpush.bf16.msra.mxu0 %v533
        %595 = vmatpush.bf16.msra.mxu0 %v529
        %596 = vmatpush.bf16.msra.mxu0 %v525
        %597 = vmatmul.bf16.gmra.mxu0 %v427
        %v598 = vpop.f32.mrf.mxu0
        %v599 = vadd.f32 0.0, %v598
        %v600 = vpop.f32.mrf.mxu0
        %v601 = vadd.f32 0.0, %v600
        %602 = vdwg.mxu0
        %603 = vmatpush.bf16.msra.mxu0 %v554
        %604 = vmatpush.bf16.msra.mxu0 %v550
        %605 = vmatpush.bf16.msra.mxu0 %v546
        %606 = vmatpush.bf16.msra.mxu0 %v542
        %607 = vmatpush.bf16.msra.mxu0 %v538
        %608 = vmatpush.bf16.msra.mxu0 %v534
        %609 = vmatpush.bf16.msra.mxu0 %v530
        %610 = vmatpush.bf16.msra.mxu0 %v526
        %611 = vmatmul.bf16.gmra.mxu0 %v427
        %v612 = vpop.f32.mrf.mxu0
        %v613 = vadd.f32 0.0, %v612
        %v614 = vpop.f32.mrf.mxu0
        %v615 = vadd.f32 0.0, %v614
        %616 = vdwg.mxu0
        %617 = vmatpush.bf16.msra.mxu0 %v555
        %618 = vmatpush.bf16.msra.mxu0 %v551
        %619 = vmatpush.bf16.msra.mxu0 %v547
        %620 = vmatpush.bf16.msra.mxu0 %v543
        %621 = vmatpush.bf16.msra.mxu0 %v539
        %622 = vmatpush.bf16.msra.mxu0 %v535
        %623 = vmatpush.bf16.msra.mxu0 %v531
        %624 = vmatpush.bf16.msra.mxu0 %v527
        %625 = vmatmul.bf16.gmra.mxu0 %v427
        %v626 = vpop.f32.mrf.mxu0
        %v627 = vadd.f32 0.0, %v626
        %v628 = vpop.f32.mrf.mxu0
        %v629 = vadd.f32 0.0, %v628
        %630 = vdwg.mxu0
        %631 = vmatpush.bf16.msra.mxu0 %v556
        %632 = vmatpush.bf16.msra.mxu0 %v552
        %633 = vmatpush.bf16.msra.mxu0 %v548
        %634 = vmatpush.bf16.msra.mxu0 %v544
        %635 = vmatpush.bf16.msra.mxu0 %v540
        %636 = vmatpush.bf16.msra.mxu0 %v536
        %637 = vmatpush.bf16.msra.mxu0 %v532
        %638 = vmatpush.bf16.msra.mxu0 %v528
        %639 = vmatmul.bf16.gmra.mxu0 %v427
        %v640 = vpop.f32.mrf.mxu0
        %v641 = vadd.f32 0.0, %v640
        %v642 = vpop.f32.mrf.mxu0
        %v643 = vadd.f32 0.0, %v642
        %644 = vdwg.mxu0
        %v646 = vunpack.c.l.b16 %v335
        %v647 = vpack.c.b16 %v646, %v646
        %vm648 = vcmask 1044480
        %v649 = vrot.slane %v408, 3
        %v650 = vrot.slane %v647, 3
        %v651 = vsel %vm648, %v649, %v650
        %v685 = vunpack.c.l.b16 %v336
        %v686 = vunpack.c.h.b16 %v336
        %v687 = vunpack.c.l.b16 %v337
        %v688 = vunpack.c.h.b16 %v337
        %v689 = vunpack.c.l.b16 %v338
        %v690 = vunpack.c.h.b16 %v338
        %v691 = vunpack.c.l.b16 %v339
        %v692 = vunpack.c.h.b16 %v339
        %v693 = vunpack.c.l.b16 %v340
        %v694 = vunpack.c.h.b16 %v340
        %v695 = vunpack.c.l.b16 %v341
        %v696 = vunpack.c.h.b16 %v341
        %v697 = vunpack.c.l.b16 %v342
        %v698 = vunpack.c.h.b16 %v342
        %v699 = vunpack.c.l.b16 %v343
        %v700 = vunpack.c.h.b16 %v343
        %v701 = vunpack.c.l.b16 %v344
        %v702 = vunpack.c.h.b16 %v344
        %v703 = vunpack.c.l.b16 %v345
        %v704 = vunpack.c.h.b16 %v345
        %v705 = vunpack.c.l.b16 %v346
        %v706 = vunpack.c.h.b16 %v346
        %v707 = vunpack.c.l.b16 %v347
        %v708 = vunpack.c.h.b16 %v347
        %v709 = vunpack.c.l.b16 %v348
        %v710 = vunpack.c.h.b16 %v348
        %v711 = vunpack.c.l.b16 %v349
        %v712 = vunpack.c.h.b16 %v349
        %v713 = vunpack.c.l.b16 %v350
        %v714 = vunpack.c.h.b16 %v350
        %v715 = vunpack.c.l.b16 %v351
        %v716 = vunpack.c.h.b16 %v351
        %v717 = vunpack.c.l.b16 %v352
        %v718 = vunpack.c.h.b16 %v352
        %v719 = vunpack.c.l.b16 %v353
        %v720 = vunpack.c.h.b16 %v353
        %v721 = vunpack.c.l.b16 %v354
        %v722 = vunpack.c.h.b16 %v354
        %v723 = vunpack.c.l.b16 %v355
        %v724 = vunpack.c.h.b16 %v355
        %v725 = vunpack.c.l.b16 %v356
        %v726 = vunpack.c.h.b16 %v356
        %v727 = vunpack.c.l.b16 %v357
        %v728 = vunpack.c.h.b16 %v357
        %v729 = vunpack.c.l.b16 %v358
        %v730 = vunpack.c.h.b16 %v358
        %v731 = vunpack.c.l.b16 %v359
        %v732 = vunpack.c.h.b16 %v359
        %v733 = vunpack.c.l.b16 %v360
        %v734 = vunpack.c.h.b16 %v360
        %v735 = vunpack.c.l.b16 %v361
        %v736 = vunpack.c.h.b16 %v361
        %v737 = vunpack.c.l.b16 %v362
        %v738 = vunpack.c.h.b16 %v362
        %v739 = vunpack.c.l.b16 %v363
        %v740 = vunpack.c.h.b16 %v363
        %v741 = vunpack.c.l.b16 %v364
        %v742 = vunpack.c.h.b16 %v364
        %v743 = vunpack.c.l.b16 %v365
        %v744 = vunpack.c.h.b16 %v365
        %v745 = vunpack.c.l.b16 %v366
        %v746 = vunpack.c.h.b16 %v366
        %v747 = vunpack.c.l.b16 %v367
        %v748 = vunpack.c.h.b16 %v367
        %v749 = vpack.c.b16 %v689, %v685
        %v750 = vpack.c.b16 %v690, %v686
        %v751 = vpack.c.b16 %v691, %v687
        %v752 = vpack.c.b16 %v692, %v688
        %v753 = vpack.c.b16 %v697, %v693
        %v754 = vpack.c.b16 %v698, %v694
        %v755 = vpack.c.b16 %v699, %v695
        %v756 = vpack.c.b16 %v700, %v696
        %v757 = vpack.c.b16 %v705, %v701
        %v758 = vpack.c.b16 %v706, %v702
        %v759 = vpack.c.b16 %v707, %v703
        %v760 = vpack.c.b16 %v708, %v704
        %v761 = vpack.c.b16 %v713, %v709
        %v762 = vpack.c.b16 %v714, %v710
        %v763 = vpack.c.b16 %v715, %v711
        %v764 = vpack.c.b16 %v716, %v712
        %v765 = vpack.c.b16 %v721, %v717
        %v766 = vpack.c.b16 %v722, %v718
        %v767 = vpack.c.b16 %v723, %v719
        %v768 = vpack.c.b16 %v724, %v720
        %v769 = vpack.c.b16 %v729, %v725
        %v770 = vpack.c.b16 %v730, %v726
        %v771 = vpack.c.b16 %v731, %v727
        %v772 = vpack.c.b16 %v732, %v728
        %v773 = vpack.c.b16 %v737, %v733
        %v774 = vpack.c.b16 %v738, %v734
        %v775 = vpack.c.b16 %v739, %v735
        %v776 = vpack.c.b16 %v740, %v736
        %v777 = vpack.c.b16 %v745, %v741
        %v778 = vpack.c.b16 %v746, %v742
        %v779 = vpack.c.b16 %v747, %v743
        %v780 = vpack.c.b16 %v748, %v744
        %813 = vmatpush.bf16.msra.mxu0 %v777
        %814 = vmatpush.bf16.msra.mxu0 %v773
        %815 = vmatpush.bf16.msra.mxu0 %v769
        %816 = vmatpush.bf16.msra.mxu0 %v765
        %817 = vmatpush.bf16.msra.mxu0 %v761
        %818 = vmatpush.bf16.msra.mxu0 %v757
        %819 = vmatpush.bf16.msra.mxu0 %v753
        %820 = vmatpush.bf16.msra.mxu0 %v749
        %821 = vmatmul.bf16.gmra.mxu0 %v651
        %v822 = vpop.f32.mrf.mxu0
        %v823 = vadd.f32 %v599, %v822
        %v824 = vpop.f32.mrf.mxu0
        %v825 = vadd.f32 %v601, %v824
        %826 = vdwg.mxu0
        %827 = vmatpush.bf16.msra.mxu0 %v778
        %828 = vmatpush.bf16.msra.mxu0 %v774
        %829 = vmatpush.bf16.msra.mxu0 %v770
        %830 = vmatpush.bf16.msra.mxu0 %v766
        %831 = vmatpush.bf16.msra.mxu0 %v762
        %832 = vmatpush.bf16.msra.mxu0 %v758
        %833 = vmatpush.bf16.msra.mxu0 %v754
        %834 = vmatpush.bf16.msra.mxu0 %v750
        %835 = vmatmul.bf16.gmra.mxu0 %v651
        %v836 = vpop.f32.mrf.mxu0
        %v837 = vadd.f32 %v613, %v836
        %v838 = vpop.f32.mrf.mxu0
        %v839 = vadd.f32 %v615, %v838
        %840 = vdwg.mxu0
        %841 = vmatpush.bf16.msra.mxu0 %v779
        %842 = vmatpush.bf16.msra.mxu0 %v775
        %843 = vmatpush.bf16.msra.mxu0 %v771
        %844 = vmatpush.bf16.msra.mxu0 %v767
        %845 = vmatpush.bf16.msra.mxu0 %v763
        %846 = vmatpush.bf16.msra.mxu0 %v759
        %847 = vmatpush.bf16.msra.mxu0 %v755
        %848 = vmatpush.bf16.msra.mxu0 %v751
        %849 = vmatmul.bf16.gmra.mxu0 %v651
        %v850 = vpop.f32.mrf.mxu0
        %v851 = vadd.f32 %v627, %v850
        %v852 = vpop.f32.mrf.mxu0
        %v853 = vadd.f32 %v629, %v852
        %854 = vdwg.mxu0
        %855 = vmatpush.bf16.msra.mxu0 %v780
        %856 = vmatpush.bf16.msra.mxu0 %v776
        %857 = vmatpush.bf16.msra.mxu0 %v772
        %858 = vmatpush.bf16.msra.mxu0 %v768
        %859 = vmatpush.bf16.msra.mxu0 %v764
        %860 = vmatpush.bf16.msra.mxu0 %v760
        %861 = vmatpush.bf16.msra.mxu0 %v756
        %862 = vmatpush.bf16.msra.mxu0 %v752
        %863 = vmatmul.bf16.gmra.mxu0 %v651
        %v864 = vpop.f32.mrf.mxu0
        %v865 = vadd.f32 %v641, %v864
        %v866 = vpop.f32.mrf.mxu0
        %v867 = vadd.f32 %v643, %v866
        %868 = vdwg.mxu0
        %s869 = scalar_lea.vmem [#allocation6], 512
        %v870 = vld [vmem:[%s869] sm:$0xff]
        %v871 = vld [vmem:[%s869 + $0x8] sm:$0xff]
        %v872 = vld [vmem:[%s869 + $0x10] sm:$0xff]
        %v873 = vld [vmem:[%s869 + $0x18] sm:$0xff]
        %v874 = vld [vmem:[%s869 + $0x20] sm:$0xff]
        %v875 = vld [vmem:[%s869 + $0x28] sm:$0xff]
        %v876 = vld [vmem:[%s869 + $0x30] sm:$0xff]
        %v877 = vld [vmem:[%s869 + $0x38] sm:$0xff]
        %v878 = vld [vmem:[%s869 + $0x40] sm:$0xff]
        %v879 = vld [vmem:[%s869 + $0x48] sm:$0xff]
        %v880 = vld [vmem:[%s869 + $0x50] sm:$0xff]
        %v881 = vld [vmem:[%s869 + $0x58] sm:$0xff]
        %v882 = vld [vmem:[%s869 + $0x60] sm:$0xff]
        %v883 = vld [vmem:[%s869 + $0x68] sm:$0xff]
        %v884 = vld [vmem:[%s869 + $0x70] sm:$0xff]
        %v885 = vld [vmem:[%s869 + $0x78] sm:$0xff]
        %v886 = vld [vmem:[%s869 + $0x80] sm:$0xff]
        %v887 = vld [vmem:[%s869 + $0x88] sm:$0xff]
        %v888 = vld [vmem:[%s869 + $0x90] sm:$0xff]
        %v889 = vld [vmem:[%s869 + $0x98] sm:$0xff]
        %v890 = vld [vmem:[%s869 + $0xa0] sm:$0xff]
        %v891 = vld [vmem:[%s869 + $0xa8] sm:$0xff]
        %v892 = vld [vmem:[%s869 + $0xb0] sm:$0xff]
        %v893 = vld [vmem:[%s869 + $0xb8] sm:$0xff]
        %v894 = vld [vmem:[%s869 + $0xc0] sm:$0xff]
        %v895 = vld [vmem:[%s869 + $0xc8] sm:$0xff]
        %v896 = vld [vmem:[%s869 + $0xd0] sm:$0xff]
        %v897 = vld [vmem:[%s869 + $0xd8] sm:$0xff]
        %v898 = vld [vmem:[%s869 + $0xe0] sm:$0xff]
        %v899 = vld [vmem:[%s869 + $0xe8] sm:$0xff]
        %v900 = vld [vmem:[%s869 + $0xf0] sm:$0xff]
        %v901 = vld [vmem:[%s869 + $0xf8] sm:$0xff]
        %v902 = vpack.c.b16 %v407, %v406
        %v936 = vunpack.c.l.b16 %v870
        %v937 = vunpack.c.h.b16 %v870
        %v938 = vunpack.c.l.b16 %v871
        %v939 = vunpack.c.h.b16 %v871
        %v940 = vunpack.c.l.b16 %v872
        %v941 = vunpack.c.h.b16 %v872
        %v942 = vunpack.c.l.b16 %v873
        %v943 = vunpack.c.h.b16 %v873
        %v944 = vunpack.c.l.b16 %v874
        %v945 = vunpack.c.h.b16 %v874
        %v946 = vunpack.c.l.b16 %v875
        %v947 = vunpack.c.h.b16 %v875
        %v948 = vunpack.c.l.b16 %v876
        %v949 = vunpack.c.h.b16 %v876
        %v950 = vunpack.c.l.b16 %v877
        %v951 = vunpack.c.h.b16 %v877
        %v952 = vunpack.c.l.b16 %v878
        %v953 = vunpack.c.h.b16 %v878
        %v954 = vunpack.c.l.b16 %v879
        %v955 = vunpack.c.h.b16 %v879
        %v956 = vunpack.c.l.b16 %v880
        %v957 = vunpack.c.h.b16 %v880
        %v958 = vunpack.c.l.b16 %v881
        %v959 = vunpack.c.h.b16 %v881
        %v960 = vunpack.c.l.b16 %v882
        %v961 = vunpack.c.h.b16 %v882
        %v962 = vunpack.c.l.b16 %v883
        %v963 = vunpack.c.h.b16 %v883
        %v964 = vunpack.c.l.b16 %v884
        %v965 = vunpack.c.h.b16 %v884
        %v966 = vunpack.c.l.b16 %v885
        %v967 = vunpack.c.h.b16 %v885
        %v968 = vunpack.c.l.b16 %v886
        %v969 = vunpack.c.h.b16 %v886
        %v970 = vunpack.c.l.b16 %v887
        %v971 = vunpack.c.h.b16 %v887
        %v972 = vunpack.c.l.b16 %v888
        %v973 = vunpack.c.h.b16 %v888
        %v974 = vunpack.c.l.b16 %v889
        %v975 = vunpack.c.h.b16 %v889
        %v976 = vunpack.c.l.b16 %v890
        %v977 = vunpack.c.h.b16 %v890
        %v978 = vunpack.c.l.b16 %v891
        %v979 = vunpack.c.h.b16 %v891
        %v980 = vunpack.c.l.b16 %v892
        %v981 = vunpack.c.h.b16 %v892
        %v982 = vunpack.c.l.b16 %v893
        %v983 = vunpack.c.h.b16 %v893
        %v984 = vunpack.c.l.b16 %v894
        %v985 = vunpack.c.h.b16 %v894
        %v986 = vunpack.c.l.b16 %v895
        %v987 = vunpack.c.h.b16 %v895
        %v988 = vunpack.c.l.b16 %v896
        %v989 = vunpack.c.h.b16 %v896
        %v990 = vunpack.c.l.b16 %v897
        %v991 = vunpack.c.h.b16 %v897
        %v992 = vunpack.c.l.b16 %v898
        %v993 = vunpack.c.h.b16 %v898
        %v994 = vunpack.c.l.b16 %v899
        %v995 = vunpack.c.h.b16 %v899
        %v996 = vunpack.c.l.b16 %v900
        %v997 = vunpack.c.h.b16 %v900
        %v998 = vunpack.c.l.b16 %v901
        %v999 = vunpack.c.h.b16 %v901
        %v1000 = vpack.c.b16 %v940, %v936
        %v1001 = vpack.c.b16 %v941, %v937
        %v1002 = vpack.c.b16 %v942, %v938
        %v1003 = vpack.c.b16 %v943, %v939
        %v1004 = vpack.c.b16 %v948, %v944
        %v1005 = vpack.c.b16 %v949, %v945
        %v1006 = vpack.c.b16 %v950, %v946
        %v1007 = vpack.c.b16 %v951, %v947
        %v1008 = vpack.c.b16 %v956, %v952
        %v1009 = vpack.c.b16 %v957, %v953
        %v1010 = vpack.c.b16 %v958, %v954
        %v1011 = vpack.c.b16 %v959, %v955
        %v1012 = vpack.c.b16 %v964, %v960
        %v1013 = vpack.c.b16 %v965, %v961
        %v1014 = vpack.c.b16 %v966, %v962
        %v1015 = vpack.c.b16 %v967, %v963
        %v1016 = vpack.c.b16 %v972, %v968
        %v1017 = vpack.c.b16 %v973, %v969
        %v1018 = vpack.c.b16 %v974, %v970
        %v1019 = vpack.c.b16 %v975, %v971
        %v1020 = vpack.c.b16 %v980, %v976
        %v1021 = vpack.c.b16 %v981, %v977
        %v1022 = vpack.c.b16 %v982, %v978
        %v1023 = vpack.c.b16 %v983, %v979
        %v1024 = vpack.c.b16 %v988, %v984
        %v1025 = vpack.c.b16 %v989, %v985
        %v1026 = vpack.c.b16 %v990, %v986
        %v1027 = vpack.c.b16 %v991, %v987
        %v1028 = vpack.c.b16 %v996, %v992
        %v1029 = vpack.c.b16 %v997, %v993
        %v1030 = vpack.c.b16 %v998, %v994
        %v1031 = vpack.c.b16 %v999, %v995
        %1064 = vmatpush.bf16.msra.mxu0 %v1028
        %1065 = vmatpush.bf16.msra.mxu0 %v1024
        %1066 = vmatpush.bf16.msra.mxu0 %v1020
        %1067 = vmatpush.bf16.msra.mxu0 %v1016
        %1068 = vmatpush.bf16.msra.mxu0 %v1012
        %1069 = vmatpush.bf16.msra.mxu0 %v1008
        %1070 = vmatpush.bf16.msra.mxu0 %v1004
        %1071 = vmatpush.bf16.msra.mxu0 %v1000
        %1072 = vmatmul.bf16.gmra.mxu0 %v902
        %v1073 = vpop.f32.mrf.mxu0
        %v1074 = vadd.f32 0.0, %v1073
        %v1075 = vpop.f32.mrf.mxu0
        %v1076 = vadd.f32 0.0, %v1075
        %1077 = vdwg.mxu0
        %1078 = vmatpush.bf16.msra.mxu0 %v1029
        %1079 = vmatpush.bf16.msra.mxu0 %v1025
        %1080 = vmatpush.bf16.msra.mxu0 %v1021
        %1081 = vmatpush.bf16.msra.mxu0 %v1017
        %1082 = vmatpush.bf16.msra.mxu0 %v1013
        %1083 = vmatpush.bf16.msra.mxu0 %v1009
        %1084 = vmatpush.bf16.msra.mxu0 %v1005
        %1085 = vmatpush.bf16.msra.mxu0 %v1001
        %1086 = vmatmul.bf16.gmra.mxu0 %v902
        %v1087 = vpop.f32.mrf.mxu0
        %v1088 = vadd.f32 0.0, %v1087
        %v1089 = vpop.f32.mrf.mxu0
        %v1090 = vadd.f32 0.0, %v1089
        %1091 = vdwg.mxu0
        %1092 = vmatpush.bf16.msra.mxu0 %v1030
        %1093 = vmatpush.bf16.msra.mxu0 %v1026
        %1094 = vmatpush.bf16.msra.mxu0 %v1022
        %1095 = vmatpush.bf16.msra.mxu0 %v1018
        %1096 = vmatpush.bf16.msra.mxu0 %v1014
        %1097 = vmatpush.bf16.msra.mxu0 %v1010
        %1098 = vmatpush.bf16.msra.mxu0 %v1006
        %1099 = vmatpush.bf16.msra.mxu0 %v1002
        %1100 = vmatmul.bf16.gmra.mxu0 %v902
        %v1101 = vpop.f32.mrf.mxu0
        %v1102 = vadd.f32 0.0, %v1101
        %v1103 = vpop.f32.mrf.mxu0
        %v1104 = vadd.f32 0.0, %v1103
        %1105 = vdwg.mxu0
        %1106 = vmatpush.bf16.msra.mxu0 %v1031
        %1107 = vmatpush.bf16.msra.mxu0 %v1027
        %1108 = vmatpush.bf16.msra.mxu0 %v1023
        %1109 = vmatpush.bf16.msra.mxu0 %v1019
        %1110 = vmatpush.bf16.msra.mxu0 %v1015
        %1111 = vmatpush.bf16.msra.mxu0 %v1011
        %1112 = vmatpush.bf16.msra.mxu0 %v1007
        %1113 = vmatpush.bf16.msra.mxu0 %v1003
        %1114 = vmatmul.bf16.gmra.mxu0 %v902
        %v1115 = vpop.f32.mrf.mxu0
        %v1116 = vadd.f32 0.0, %v1115
        %v1117 = vpop.f32.mrf.mxu0
        %v1118 = vadd.f32 0.0, %v1117
        %1119 = vdwg.mxu0
        %v1120 = vadd.f32 %v823, %v1074
        %v1121 = vadd.f32 %v837, %v1088
        %v1122 = vadd.f32 %v851, %v1102
        %v1123 = vadd.f32 %v865, %v1116
        %v1124 = vadd.f32 %v825, %v1076
        %v1125 = vadd.f32 %v839, %v1090
        %v1126 = vadd.f32 %v853, %v1104
        %v1127 = vadd.f32 %v867, %v1118
        %v1128 = vld [vmem:[#allocation2 + $0x4] sm:$0xf]
        %v1129 = vld [vmem:[#allocation2 + $0x8] sm:$0xf]
        %v1130 = vld [vmem:[#allocation2 + $0xc] sm:$0x1]
        %s1131 = scalar_lea.vmem [#allocation6], 768
        %v1132 = vld [vmem:[%s1131] sm:$0xff]
        %v1133 = vld [vmem:[%s1131 + $0x8] sm:$0xff]
        %v1134 = vld [vmem:[%s1131 + $0x10] sm:$0xff]
        %v1135 = vld [vmem:[%s1131 + $0x18] sm:$0xff]
        %v1136 = vld [vmem:[%s1131 + $0x20] sm:$0xff]
        %v1137 = vld [vmem:[%s1131 + $0x28] sm:$0xff]
        %v1138 = vld [vmem:[%s1131 + $0x30] sm:$0xff]
        %v1139 = vld [vmem:[%s1131 + $0x38] sm:$0xff]
        %v1140 = vld [vmem:[%s1131 + $0x40] sm:$0xff]
        %v1141 = vld [vmem:[%s1131 + $0x48] sm:$0xff]
        %v1142 = vld [vmem:[%s1131 + $0x50] sm:$0xff]
        %v1143 = vld [vmem:[%s1131 + $0x58] sm:$0xff]
        %v1144 = vld [vmem:[%s1131 + $0x60] sm:$0xff]
        %v1145 = vld [vmem:[%s1131 + $0x68] sm:$0xff]
        %v1146 = vld [vmem:[%s1131 + $0x70] sm:$0xff]
        %v1147 = vld [vmem:[%s1131 + $0x78] sm:$0xff]
        %v1148 = vld [vmem:[%s1131 + $0x80] sm:$0xff]
        %v1149 = vld [vmem:[%s1131 + $0x88] sm:$0xff]
        %v1150 = vld [vmem:[%s1131 + $0x90] sm:$0xff]
        %v1151 = vld [vmem:[%s1131 + $0x98] sm:$0xff]
        %v1152 = vld [vmem:[%s1131 + $0xa0] sm:$0xff]
        %v1153 = vld [vmem:[%s1131 + $0xa8] sm:$0xff]
        %v1154 = vld [vmem:[%s1131 + $0xb0] sm:$0xff]
        %v1155 = vld [vmem:[%s1131 + $0xb8] sm:$0xff]
        %v1156 = vld [vmem:[%s1131 + $0xc0] sm:$0xff]
        %v1157 = vld [vmem:[%s1131 + $0xc8] sm:$0xff]
        %v1158 = vld [vmem:[%s1131 + $0xd0] sm:$0xff]
        %v1159 = vld [vmem:[%s1131 + $0xd8] sm:$0xff]
        %v1160 = vld [vmem:[%s1131 + $0xe0] sm:$0xff]
        %v1161 = vld [vmem:[%s1131 + $0xe8] sm:$0xff]
        %v1162 = vld [vmem:[%s1131 + $0xf0] sm:$0xff]
        %v1163 = vld [vmem:[%s1131 + $0xf8] sm:$0xff]
        %v1167 = vunpack.c.l.b16 %v1128
        %v1168 = vunpack.c.l.b16 %v1129
        %v1169 = vunpack.c.l.b16 %v1130
        %v1170 = vpack.c.b16 %v1168, %v1167
        %v1171 = vpack.c.b16 %v1169, %v1169
        %vm1172 = vsmask.f32 7424
        %v1174 = vshrl.u32 %v1170, 16
        %v1176 = vshll.u32 %v1170, 16
        %v1178 = vrot.slane %v1176, 1
        %v1179 = vor.u32 %v1174, %v1178
        %v1181 = vshll.u32 %v1171, 16
        %v1183 = vrot.slane %v1181, 1
        %v1184 = vsel %vm1172, %v1179, %v1183
        %v1218 = vunpack.c.l.b16 %v1132
        %v1219 = vunpack.c.h.b16 %v1132
        %v1220 = vunpack.c.l.b16 %v1133
        %v1221 = vunpack.c.h.b16 %v1133
        %v1222 = vunpack.c.l.b16 %v1134
        %v1223 = vunpack.c.h.b16 %v1134
        %v1224 = vunpack.c.l.b16 %v1135
        %v1225 = vunpack.c.h.b16 %v1135
        %v1226 = vunpack.c.l.b16 %v1136
        %v1227 = vunpack.c.h.b16 %v1136
        %v1228 = vunpack.c.l.b16 %v1137
        %v1229 = vunpack.c.h.b16 %v1137
        %v1230 = vunpack.c.l.b16 %v1138
        %v1231 = vunpack.c.h.b16 %v1138
        %v1232 = vunpack.c.l.b16 %v1139
        %v1233 = vunpack.c.h.b16 %v1139
        %v1234 = vunpack.c.l.b16 %v1140
        %v1235 = vunpack.c.h.b16 %v1140
        %v1236 = vunpack.c.l.b16 %v1141
        %v1237 = vunpack.c.h.b16 %v1141
        %v1238 = vunpack.c.l.b16 %v1142
        %v1239 = vunpack.c.h.b16 %v1142
        %v1240 = vunpack.c.l.b16 %v1143
        %v1241 = vunpack.c.h.b16 %v1143
        %v1242 = vunpack.c.l.b16 %v1144
        %v1243 = vunpack.c.h.b16 %v1144
        %v1244 = vunpack.c.l.b16 %v1145
        %v1245 = vunpack.c.h.b16 %v1145
        %v1246 = vunpack.c.l.b16 %v1146
        %v1247 = vunpack.c.h.b16 %v1146
        %v1248 = vunpack.c.l.b16 %v1147
        %v1249 = vunpack.c.h.b16 %v1147
        %v1250 = vunpack.c.l.b16 %v1148
        %v1251 = vunpack.c.h.b16 %v1148
        %v1252 = vunpack.c.l.b16 %v1149
        %v1253 = vunpack.c.h.b16 %v1149
        %v1254 = vunpack.c.l.b16 %v1150
        %v1255 = vunpack.c.h.b16 %v1150
        %v1256 = vunpack.c.l.b16 %v1151
        %v1257 = vunpack.c.h.b16 %v1151
        %v1258 = vunpack.c.l.b16 %v1152
        %v1259 = vunpack.c.h.b16 %v1152
        %v1260 = vunpack.c.l.b16 %v1153
        %v1261 = vunpack.c.h.b16 %v1153
        %v1262 = vunpack.c.l.b16 %v1154
        %v1263 = vunpack.c.h.b16 %v1154
        %v1264 = vunpack.c.l.b16 %v1155
        %v1265 = vunpack.c.h.b16 %v1155
        %v1266 = vunpack.c.l.b16 %v1156
        %v1267 = vunpack.c.h.b16 %v1156
        %v1268 = vunpack.c.l.b16 %v1157
        %v1269 = vunpack.c.h.b16 %v1157
        %v1270 = vunpack.c.l.b16 %v1158
        %v1271 = vunpack.c.h.b16 %v1158
        %v1272 = vunpack.c.l.b16 %v1159
        %v1273 = vunpack.c.h.b16 %v1159
        %v1274 = vunpack.c.l.b16 %v1160
        %v1275 = vunpack.c.h.b16 %v1160
        %v1276 = vunpack.c.l.b16 %v1161
        %v1277 = vunpack.c.h.b16 %v1161
        %v1278 = vunpack.c.l.b16 %v1162
        %v1279 = vunpack.c.h.b16 %v1162
        %v1280 = vunpack.c.l.b16 %v1163
        %v1281 = vunpack.c.h.b16 %v1163
        %v1282 = vpack.c.b16 %v1222, %v1218
        %v1283 = vpack.c.b16 %v1223, %v1219
        %v1284 = vpack.c.b16 %v1224, %v1220
        %v1285 = vpack.c.b16 %v1225, %v1221
        %v1286 = vpack.c.b16 %v1230, %v1226
        %v1287 = vpack.c.b16 %v1231, %v1227
        %v1288 = vpack.c.b16 %v1232, %v1228
        %v1289 = vpack.c.b16 %v1233, %v1229
        %v1290 = vpack.c.b16 %v1238, %v1234
        %v1291 = vpack.c.b16 %v1239, %v1235
        %v1292 = vpack.c.b16 %v1240, %v1236
        %v1293 = vpack.c.b16 %v1241, %v1237
        %v1294 = vpack.c.b16 %v1246, %v1242
        %v1295 = vpack.c.b16 %v1247, %v1243
        %v1296 = vpack.c.b16 %v1248, %v1244
        %v1297 = vpack.c.b16 %v1249, %v1245
        %v1298 = vpack.c.b16 %v1254, %v1250
        %v1299 = vpack.c.b16 %v1255, %v1251
        %v1300 = vpack.c.b16 %v1256, %v1252
        %v1301 = vpack.c.b16 %v1257, %v1253
        %v1302 = vpack.c.b16 %v1262, %v1258
        %v1303 = vpack.c.b16 %v1263, %v1259
        %v1304 = vpack.c.b16 %v1264, %v1260
        %v1305 = vpack.c.b16 %v1265, %v1261
        %v1306 = vpack.c.b16 %v1270, %v1266
        %v1307 = vpack.c.b16 %v1271, %v1267
        %v1308 = vpack.c.b16 %v1272, %v1268
        %v1309 = vpack.c.b16 %v1273, %v1269
        %v1310 = vpack.c.b16 %v1278, %v1274
        %v1311 = vpack.c.b16 %v1279, %v1275
        %v1312 = vpack.c.b16 %v1280, %v1276
        %v1313 = vpack.c.b16 %v1281, %v1277
        %1346 = vmatpush.bf16.msra.mxu0 %v1310
        %1347 = vmatpush.bf16.msra.mxu0 %v1306
        %1348 = vmatpush.bf16.msra.mxu0 %v1302
        %1349 = vmatpush.bf16.msra.mxu0 %v1298
        %1350 = vmatpush.bf16.msra.mxu0 %v1294
        %1351 = vmatpush.bf16.msra.mxu0 %v1290
        %1352 = vmatpush.bf16.msra.mxu0 %v1286
        %1353 = vmatpush.bf16.msra.mxu0 %v1282
        %1354 = vmatmul.bf16.gmra.mxu0 %v1184
        %v1355 = vpop.f32.mrf.mxu0
        %v1356 = vadd.f32 0.0, %v1355
        %v1357 = vpop.f32.mrf.mxu0
        %v1358 = vadd.f32 0.0, %v1357
        %1359 = vdwg.mxu0
        %1360 = vmatpush.bf16.msra.mxu0 %v1311
        %1361 = vmatpush.bf16.msra.mxu0 %v1307
        %1362 = vmatpush.bf16.msra.mxu0 %v1303
        %1363 = vmatpush.bf16.msra.mxu0 %v1299
        %1364 = vmatpush.bf16.msra.mxu0 %v1295
        %1365 = vmatpush.bf16.msra.mxu0 %v1291
        %1366 = vmatpush.bf16.msra.mxu0 %v1287
        %1367 = vmatpush.bf16.msra.mxu0 %v1283
        %1368 = vmatmul.bf16.gmra.mxu0 %v1184
        %v1369 = vpop.f32.mrf.mxu0
        %v1370 = vadd.f32 0.0, %v1369
        %v1371 = vpop.f32.mrf.mxu0
        %v1372 = vadd.f32 0.0, %v1371
        %1373 = vdwg.mxu0
        %1374 = vmatpush.bf16.msra.mxu0 %v1312
        %1375 = vmatpush.bf16.msra.mxu0 %v1308
        %1376 = vmatpush.bf16.msra.mxu0 %v1304
        %1377 = vmatpush.bf16.msra.mxu0 %v1300
        %1378 = vmatpush.bf16.msra.mxu0 %v1296
        %1379 = vmatpush.bf16.msra.mxu0 %v1292
        %1380 = vmatpush.bf16.msra.mxu0 %v1288
        %1381 = vmatpush.bf16.msra.mxu0 %v1284
        %1382 = vmatmul.bf16.gmra.mxu0 %v1184
        %v1383 = vpop.f32.mrf.mxu0
        %v1384 = vadd.f32 0.0, %v1383
        %v1385 = vpop.f32.mrf.mxu0
        %v1386 = vadd.f32 0.0, %v1385
        %1387 = vdwg.mxu0
        %1388 = vmatpush.bf16.msra.mxu0 %v1313
        %1389 = vmatpush.bf16.msra.mxu0 %v1309
        %1390 = vmatpush.bf16.msra.mxu0 %v1305
        %1391 = vmatpush.bf16.msra.mxu0 %v1301
        %1392 = vmatpush.bf16.msra.mxu0 %v1297
        %1393 = vmatpush.bf16.msra.mxu0 %v1293
        %1394 = vmatpush.bf16.msra.mxu0 %v1289
        %1395 = vmatpush.bf16.msra.mxu0 %v1285
        %1396 = vmatmul.bf16.gmra.mxu0 %v1184
        %v1397 = vpop.f32.mrf.mxu0
        %v1398 = vadd.f32 0.0, %v1397
        %v1399 = vpop.f32.mrf.mxu0
        %v1400 = vadd.f32 0.0, %v1399
        %1401 = vdwg.mxu0
        %v1402 = vadd.f32 %v1120, %v1356
        %v1403 = vadd.f32 %v1121, %v1370
        %v1404 = vadd.f32 %v1122, %v1384
        %v1405 = vadd.f32 %v1123, %v1398
        %v1406 = vadd.f32 %v1124, %v1358
        %v1407 = vadd.f32 %v1125, %v1372
        %v1408 = vadd.f32 %v1126, %v1386
        %v1409 = vadd.f32 %v1127, %v1400
        %v1410 = vld [vmem:[#allocation2 + $0x4] sm:$0xe]
        %s1411 = scalar_lea.vmem [#allocation6], 1024
        %v1412 = vld [vmem:[%s1411] sm:$0xff]
        %v1413 = vld [vmem:[%s1411 + $0x8] sm:$0xff]
        %v1414 = vld [vmem:[%s1411 + $0x10] sm:$0xff]
        %v1415 = vld [vmem:[%s1411 + $0x18] sm:$0xff]
        %v1416 = vld [vmem:[%s1411 + $0x20] sm:$0xff]
        %v1417 = vld [vmem:[%s1411 + $0x28] sm:$0xff]
        %v1418 = vld [vmem:[%s1411 + $0x30] sm:$0xff]
        %v1419 = vld [vmem:[%s1411 + $0x38] sm:$0xff]
        %v1420 = vld [vmem:[%s1411 + $0x40] sm:$0xff]
        %v1421 = vld [vmem:[%s1411 + $0x48] sm:$0xff]
        %v1422 = vld [vmem:[%s1411 + $0x50] sm:$0xff]
        %v1423 = vld [vmem:[%s1411 + $0x58] sm:$0xff]
        %v1424 = vld [vmem:[%s1411 + $0x60] sm:$0xff]
        %v1425 = vld [vmem:[%s1411 + $0x68] sm:$0xff]
        %v1426 = vld [vmem:[%s1411 + $0x70] sm:$0xff]
        %v1427 = vld [vmem:[%s1411 + $0x78] sm:$0xff]
        %v1428 = vld [vmem:[%s1411 + $0x80] sm:$0xff]
        %v1429 = vld [vmem:[%s1411 + $0x88] sm:$0xff]
        %v1430 = vld [vmem:[%s1411 + $0x90] sm:$0xff]
        %v1431 = vld [vmem:[%s1411 + $0x98] sm:$0xff]
        %v1432 = vld [vmem:[%s1411 + $0xa0] sm:$0xff]
        %v1433 = vld [vmem:[%s1411 + $0xa8] sm:$0xff]
        %v1434 = vld [vmem:[%s1411 + $0xb0] sm:$0xff]
        %v1435 = vld [vmem:[%s1411 + $0xb8] sm:$0xff]
        %v1436 = vld [vmem:[%s1411 + $0xc0] sm:$0xff]
        %v1437 = vld [vmem:[%s1411 + $0xc8] sm:$0xff]
        %v1438 = vld [vmem:[%s1411 + $0xd0] sm:$0xff]
        %v1439 = vld [vmem:[%s1411 + $0xd8] sm:$0xff]
        %v1440 = vld [vmem:[%s1411 + $0xe0] sm:$0xff]
        %v1441 = vld [vmem:[%s1411 + $0xe8] sm:$0xff]
        %v1442 = vld [vmem:[%s1411 + $0xf0] sm:$0xff]
        %v1443 = vld [vmem:[%s1411 + $0xf8] sm:$0xff]
        %v1445 = vunpack.c.l.b16 %v1410
        %v1446 = vpack.c.b16 %v1168, %v1445
        %vm1447 = vcmask 1046528
        %v1448 = vrot.slane %v1446, 1
        %v1449 = vrot.slane %v1171, 1
        %v1450 = vsel %vm1447, %v1448, %v1449
        %v1484 = vunpack.c.l.b16 %v1412
        %v1485 = vunpack.c.h.b16 %v1412
        %v1486 = vunpack.c.l.b16 %v1413
        %v1487 = vunpack.c.h.b16 %v1413
        %v1488 = vunpack.c.l.b16 %v1414
        %v1489 = vunpack.c.h.b16 %v1414
        %v1490 = vunpack.c.l.b16 %v1415
        %v1491 = vunpack.c.h.b16 %v1415
        %v1492 = vunpack.c.l.b16 %v1416
        %v1493 = vunpack.c.h.b16 %v1416
        %v1494 = vunpack.c.l.b16 %v1417
        %v1495 = vunpack.c.h.b16 %v1417
        %v1496 = vunpack.c.l.b16 %v1418
        %v1497 = vunpack.c.h.b16 %v1418
        %v1498 = vunpack.c.l.b16 %v1419
        %v1499 = vunpack.c.h.b16 %v1419
        %v1500 = vunpack.c.l.b16 %v1420
        %v1501 = vunpack.c.h.b16 %v1420
        %v1502 = vunpack.c.l.b16 %v1421
        %v1503 = vunpack.c.h.b16 %v1421
        %v1504 = vunpack.c.l.b16 %v1422
        %v1505 = vunpack.c.h.b16 %v1422
        %v1506 = vunpack.c.l.b16 %v1423
        %v1507 = vunpack.c.h.b16 %v1423
        %v1508 = vunpack.c.l.b16 %v1424
        %v1509 = vunpack.c.h.b16 %v1424
        %v1510 = vunpack.c.l.b16 %v1425
        %v1511 = vunpack.c.h.b16 %v1425
        %v1512 = vunpack.c.l.b16 %v1426
        %v1513 = vunpack.c.h.b16 %v1426
        %v1514 = vunpack.c.l.b16 %v1427
        %v1515 = vunpack.c.h.b16 %v1427
        %v1516 = vunpack.c.l.b16 %v1428
        %v1517 = vunpack.c.h.b16 %v1428
        %v1518 = vunpack.c.l.b16 %v1429
        %v1519 = vunpack.c.h.b16 %v1429
        %v1520 = vunpack.c.l.b16 %v1430
        %v1521 = vunpack.c.h.b16 %v1430
        %v1522 = vunpack.c.l.b16 %v1431
        %v1523 = vunpack.c.h.b16 %v1431
        %v1524 = vunpack.c.l.b16 %v1432
        %v1525 = vunpack.c.h.b16 %v1432
        %v1526 = vunpack.c.l.b16 %v1433
        %v1527 = vunpack.c.h.b16 %v1433
        %v1528 = vunpack.c.l.b16 %v1434
        %v1529 = vunpack.c.h.b16 %v1434
        %v1530 = vunpack.c.l.b16 %v1435
        %v1531 = vunpack.c.h.b16 %v1435
        %v1532 = vunpack.c.l.b16 %v1436
        %v1533 = vunpack.c.h.b16 %v1436
        %v1534 = vunpack.c.l.b16 %v1437
        %v1535 = vunpack.c.h.b16 %v1437
        %v1536 = vunpack.c.l.b16 %v1438
        %v1537 = vunpack.c.h.b16 %v1438
        %v1538 = vunpack.c.l.b16 %v1439
        %v1539 = vunpack.c.h.b16 %v1439
        %v1540 = vunpack.c.l.b16 %v1440
        %v1541 = vunpack.c.h.b16 %v1440
        %v1542 = vunpack.c.l.b16 %v1441
        %v1543 = vunpack.c.h.b16 %v1441
        %v1544 = vunpack.c.l.b16 %v1442
        %v1545 = vunpack.c.h.b16 %v1442
        %v1546 = vunpack.c.l.b16 %v1443
        %v1547 = vunpack.c.h.b16 %v1443
        %v1548 = vpack.c.b16 %v1488, %v1484
        %v1549 = vpack.c.b16 %v1489, %v1485
        %v1550 = vpack.c.b16 %v1490, %v1486
        %v1551 = vpack.c.b16 %v1491, %v1487
        %v1552 = vpack.c.b16 %v1496, %v1492
        %v1553 = vpack.c.b16 %v1497, %v1493
        %v1554 = vpack.c.b16 %v1498, %v1494
        %v1555 = vpack.c.b16 %v1499, %v1495
        %v1556 = vpack.c.b16 %v1504, %v1500
        %v1557 = vpack.c.b16 %v1505, %v1501
        %v1558 = vpack.c.b16 %v1506, %v1502
        %v1559 = vpack.c.b16 %v1507, %v1503
        %v1560 = vpack.c.b16 %v1512, %v1508
        %v1561 = vpack.c.b16 %v1513, %v1509
        %v1562 = vpack.c.b16 %v1514, %v1510
        %v1563 = vpack.c.b16 %v1515, %v1511
        %v1564 = vpack.c.b16 %v1520, %v1516
        %v1565 = vpack.c.b16 %v1521, %v1517
        %v1566 = vpack.c.b16 %v1522, %v1518
        %v1567 = vpack.c.b16 %v1523, %v1519
        %v1568 = vpack.c.b16 %v1528, %v1524
        %v1569 = vpack.c.b16 %v1529, %v1525
        %v1570 = vpack.c.b16 %v1530, %v1526
        %v1571 = vpack.c.b16 %v1531, %v1527
        %v1572 = vpack.c.b16 %v1536, %v1532
        %v1573 = vpack.c.b16 %v1537, %v1533
        %v1574 = vpack.c.b16 %v1538, %v1534
        %v1575 = vpack.c.b16 %v1539, %v1535
        %v1576 = vpack.c.b16 %v1544, %v1540
        %v1577 = vpack.c.b16 %v1545, %v1541
        %v1578 = vpack.c.b16 %v1546, %v1542
        %v1579 = vpack.c.b16 %v1547, %v1543
        %1612 = vmatpush.bf16.msra.mxu0 %v1576
        %1613 = vmatpush.bf16.msra.mxu0 %v1572
        %1614 = vmatpush.bf16.msra.mxu0 %v1568
        %1615 = vmatpush.bf16.msra.mxu0 %v1564
        %1616 = vmatpush.bf16.msra.mxu0 %v1560
        %1617 = vmatpush.bf16.msra.mxu0 %v1556
        %1618 = vmatpush.bf16.msra.mxu0 %v1552
        %1619 = vmatpush.bf16.msra.mxu0 %v1548
        %1620 = vmatmul.bf16.gmra.mxu0 %v1450
        %v1621 = vpop.f32.mrf.mxu0
        %v1622 = vadd.f32 0.0, %v1621
        %v1623 = vpop.f32.mrf.mxu0
        %v1624 = vadd.f32 0.0, %v1623
        %1625 = vdwg.mxu0
        %1626 = vmatpush.bf16.msra.mxu0 %v1577
        %1627 = vmatpush.bf16.msra.mxu0 %v1573
        %1628 = vmatpush.bf16.msra.mxu0 %v1569
        %1629 = vmatpush.bf16.msra.mxu0 %v1565
        %1630 = vmatpush.bf16.msra.mxu0 %v1561
        %1631 = vmatpush.bf16.msra.mxu0 %v1557
        %1632 = vmatpush.bf16.msra.mxu0 %v1553
        %1633 = vmatpush.bf16.msra.mxu0 %v1549
        %1634 = vmatmul.bf16.gmra.mxu0 %v1450
        %v1635 = vpop.f32.mrf.mxu0
        %v1636 = vadd.f32 0.0, %v1635
        %v1637 = vpop.f32.mrf.mxu0
        %v1638 = vadd.f32 0.0, %v1637
        %1639 = vdwg.mxu0
        %1640 = vmatpush.bf16.msra.mxu0 %v1578
        %1641 = vmatpush.bf16.msra.mxu0 %v1574
        %1642 = vmatpush.bf16.msra.mxu0 %v1570
        %1643 = vmatpush.bf16.msra.mxu0 %v1566
        %1644 = vmatpush.bf16.msra.mxu0 %v1562
        %1645 = vmatpush.bf16.msra.mxu0 %v1558
        %1646 = vmatpush.bf16.msra.mxu0 %v1554
        %1647 = vmatpush.bf16.msra.mxu0 %v1550
        %1648 = vmatmul.bf16.gmra.mxu0 %v1450
        %v1649 = vpop.f32.mrf.mxu0
        %v1650 = vadd.f32 0.0, %v1649
        %v1651 = vpop.f32.mrf.mxu0
        %v1652 = vadd.f32 0.0, %v1651
        %1653 = vdwg.mxu0
        %1654 = vmatpush.bf16.msra.mxu0 %v1579
        %1655 = vmatpush.bf16.msra.mxu0 %v1575
        %1656 = vmatpush.bf16.msra.mxu0 %v1571
        %1657 = vmatpush.bf16.msra.mxu0 %v1567
        %1658 = vmatpush.bf16.msra.mxu0 %v1563
        %1659 = vmatpush.bf16.msra.mxu0 %v1559
        %1660 = vmatpush.bf16.msra.mxu0 %v1555
        %1661 = vmatpush.bf16.msra.mxu0 %v1551
        %1662 = vmatmul.bf16.gmra.mxu0 %v1450
        %v1663 = vpop.f32.mrf.mxu0
        %v1664 = vadd.f32 0.0, %v1663
        %v1665 = vpop.f32.mrf.mxu0
        %v1666 = vadd.f32 0.0, %v1665
        %1667 = vdwg.mxu0
        %v1668 = vadd.f32 %v1402, %v1622
        %v1669 = vadd.f32 %v1403, %v1636
        %v1670 = vadd.f32 %v1404, %v1650
        %v1671 = vadd.f32 %v1405, %v1664
        %v1672 = vadd.f32 %v1406, %v1624
        %v1673 = vadd.f32 %v1407, %v1638
        %v1674 = vadd.f32 %v1408, %v1652
        %v1675 = vadd.f32 %v1409, %v1666
        %v1676 = vpack.c.bf16 %v1669, %v1668
        %v1677 = vpack.c.bf16 %v1671, %v1670
        %v1678 = vpack.c.bf16 %v1673, %v1672
        %v1679 = vpack.c.bf16 %v1675, %v1674
        %1680 = vst [vmem:[%s309] sm:$0xff] %v1676
        %1681 = vst [vmem:[%s309 + $0x8] sm:$0xff] %v1677
        %1682 = vst [vmem:[%s309 + $0x10] sm:$0xff] %v1678
        %1683 = vst [vmem:[%s309 + $0x18] sm:$0xff] %v1679
        %v1684 = vld [vmem:[#allocation12] sm:$0xf]
        %v1685 = vadd.f32 %v1668, %v1672
        %v1686 = vrot.slane %v1685, 4
        %v1687 = vadd.f32 %v1685, %v1686
        %v1688 = vrot.slane %v1687, 2
        %v1689 = vadd.f32 %v1687, %v1688
        %v1690 = vrot.slane %v1689, 1
        %v1691 = vadd.f32 %v1689, %v1690
        %v1692 = vadd.f32 %v1669, %v1673
        %v1693 = vrot.slane %v1692, 4
        %v1694 = vadd.f32 %v1692, %v1693
        %v1695 = vrot.slane %v1694, 2
        %v1696 = vadd.f32 %v1694, %v1695
        %v1697 = vrot.slane %v1696, 1
        %v1698 = vadd.f32 %v1696, %v1697
        %v1699 = vadd.f32 %v1670, %v1674
        %v1700 = vrot.slane %v1699, 4
        %v1701 = vadd.f32 %v1699, %v1700
        %v1702 = vrot.slane %v1701, 2
        %v1703 = vadd.f32 %v1701, %v1702
        %v1704 = vrot.slane %v1703, 1
        %v1705 = vadd.f32 %v1703, %v1704
        %v1706 = vadd.f32 %v1671, %v1675
        %v1707 = vrot.slane %v1706, 4
        %v1708 = vadd.f32 %v1706, %v1707
        %v1709 = vrot.slane %v1708, 2
        %v1710 = vadd.f32 %v1708, %v1709
        %v1711 = vrot.slane %v1710, 1
        %v1712 = vadd.f32 %v1710, %v1711
        %v1717 = vrot.slane %v1698, 7
        %v1718 = vrot.slane %v1705, 6
        %v1719 = vrot.slane %v1712, 5
        %vm1720 = vcmask 1040384
        %v1721 = vsel %vm1720, %v1691, %v1717
        %vm1722 = vcmask 1042434
        %v1723 = vsel %vm1722, %v1718, %v1719
        %vm1724 = vcmask 1041408
        %v1725 = vsel %vm1724, %v1721, %v1723
        %v1727 = vadd.f32 %v1684, %v1725
        %v1728 = vlaneseq
        %vm1729 = vcmp.ge.s32.totalorder %v1728, 0
        %vm1730 = vcmp.lt.s32.totalorder %v1728, 512
        %vm1731 = vmand %vm1729, %vm1730
        %1732 = vst.msk [vmem:[#allocation12] sm:$0xf] %vm1731, %v1727
        %v1733 = vld [vmem:[#allocation14] sm:$0xf]
        %v1734 = vmul.f32 %v1668, %v1668
        %v1735 = vmul.f32 %v1669, %v1669
        %v1736 = vmul.f32 %v1670, %v1670
        %v1737 = vmul.f32 %v1671, %v1671
        %v1738 = vmul.f32 %v1672, %v1672
        %v1739 = vmul.f32 %v1673, %v1673
        %v1740 = vmul.f32 %v1674, %v1674
        %v1741 = vmul.f32 %v1675, %v1675
        %v1742 = vadd.f32 %v1734, %v1738
        %v1743 = vrot.slane %v1742, 4
        %v1744 = vadd.f32 %v1742, %v1743
        %v1745 = vrot.slane %v1744, 2
        %v1746 = vadd.f32 %v1744, %v1745
        %v1747 = vrot.slane %v1746, 1
        %v1748 = vadd.f32 %v1746, %v1747
        %v1749 = vadd.f32 %v1735, %v1739
        %v1750 = vrot.slane %v1749, 4
        %v1751 = vadd.f32 %v1749, %v1750
        %v1752 = vrot.slane %v1751, 2
        %v1753 = vadd.f32 %v1751, %v1752
        %v1754 = vrot.slane %v1753, 1
        %v1755 = vadd.f32 %v1753, %v1754
        %v1756 = vadd.f32 %v1736, %v1740
        %v1757 = vrot.slane %v1756, 4
        %v1758 = vadd.f32 %v1756, %v1757
        %v1759 = vrot.slane %v1758, 2
        %v1760 = vadd.f32 %v1758, %v1759
        %v1761 = vrot.slane %v1760, 1
        %v1762 = vadd.f32 %v1760, %v1761
        %v1763 = vadd.f32 %v1737, %v1741
        %v1764 = vrot.slane %v1763, 4
        %v1765 = vadd.f32 %v1763, %v1764
        %v1766 = vrot.slane %v1765, 2
        %v1767 = vadd.f32 %v1765, %v1766
        %v1768 = vrot.slane %v1767, 1
        %v1769 = vadd.f32 %v1767, %v1768
        %v1774 = vrot.slane %v1755, 7
        %v1775 = vrot.slane %v1762, 6
        %v1776 = vrot.slane %v1769, 5
        %v1777 = vsel %vm1720, %v1748, %v1774
        %v1778 = vsel %vm1722, %v1775, %v1776
        %v1779 = vsel %vm1724, %v1777, %v1778
        %v1781 = vadd.f32 %v1733, %v1779
        %1782 = vst.msk [vmem:[#allocation14] sm:$0xf] %vm1731, %v1781
        %p1783 = scmp.eq.s32.totalorder %s27, 1
        // Predicated region
        $region57: #{tpu_custom_call.1} parent=35 // pred_check
          %p1784 = pneg %p1783
        $region58: #{tpu_custom_call.1} parent=35 // pred_check_branch
          %1786 = sbr.rel (%p1784) target = $region60
        $region59: #{tpu_custom_call.1} parent=35 // pred_region
          %v1787 = vld [vmem:[#allocation12] sm:$0xf]
          %v1788 = vmul.f32 %v1787, 0.03125
          %v1789 = vld [vmem:[#allocation14] sm:$0xf]
          %v1790 = vmul.f32 %v1789, 0.03125
          %v1791 = vmul.f32 %v1788, %v1788
          %v1792 = vsub.f32 %v1790, %v1791
          %v1793 = vmax.f32 %v1792, 0.0
          %v1794 = vadd.f32 %v1793, 1e-05
          %v1795 = vrsqrt.pop %v1794
          %v1796 = vmul.f32 %v1795, %v1794
          %v1797 = vmul.f32 %v1796, %v1795
          %v1798 = vmul.f32 0.5, %v1797
          %v1799 = vsub.f32 1.5, %v1798
          %v1800 = vmul.f32 %v1795, %v1799
          %vm1801 = vweird.f32 %v1794
          %vm1802 = vweird.f32 %v1795
          %vm1803 = vmor %vm1801, %vm1802
          %v1804 = vsel %vm1803, %v1795, %v1800
          %v1805 = vld [vmem:[#allocation8] sm:$0xf]
          %v1806 = vmul.f32 %v1804, %v1805
          %1807 = vst.msk [vmem:[#allocation12] sm:$0xf] %vm1731, %v1806
          %v1808 = vld [vmem:[#allocation9] sm:$0xf]
          %v1809 = vmul.f32 %v1788, %v1806
          %v1810 = vsub.f32 %v1808, %v1809
          %1811 = vst.msk [vmem:[#allocation14] sm:$0xf] %vm1731, %v1810
        $region60: #{tpu_custom_call.1} parent=35 // pred_fallthru
          _
        %s1812 = sand.u32 %s124, 1
        %s1813 = scalar_lea.sflag [#allocation5], %s1812
        %s1814 = sand.u32 %s124, 1
        %s1815 = smul.addr %s1814, 32
        %s1816 = scalar_lea.vmem [#allocation11], %s1815
        // Predicated region
        $region61: #{tpu_custom_call.1} parent=35 // pred_check
          %p1817 = pneg %p134
        $region62: #{tpu_custom_call.1} parent=35 // pred_check_branch
          %1819 = sbr.rel (%p1817) target = $region64
        $region63: #{tpu_custom_call.1} parent=35 // pred_region
          %1821 = vsyncadd %s1813, 0
          %s1822 = smul.addr %s27, 8
          %s1823 = smul.addr %s1822, 4
          %s1824 = scalar_lea.hbm %s4, %s1823
          %s1825 = sshll.u32 %s1816, 4
          %s1826 = int_to_ptr.vmem [resolvable:$true] %s1825
          %s1827 = sshll.u32 %s1824, 4
          %s1828 = int_to_ptr.hbm [resolvable:$true] %s1827
          %1833 = dma.vmem_to_hbm [thread:$0]  %s1826, 512, %s1828, %s1813, 256, 256, 16
        $region64: #{tpu_custom_call.1} parent=35 // pred_fallthru
          _
        // Predicated region
        $region65: #{tpu_custom_call.1} parent=35 // pred_check
          %p1834 = pneg %p155
        $region66: #{tpu_custom_call.1} parent=35 // pred_check_branch
          %1836 = sbr.rel (%p1834) target = $region68
        $region67: #{tpu_custom_call.1} parent=35 // pred_region
          %1838 = vsyncadd [#allocation13], 0
          %s1840 = sshll.u32 [#allocation12], 4
          %s1841 = int_to_ptr.vmem [resolvable:$true] %s1840
          %s1842 = sshll.u32 %s5, 4
          %s1843 = int_to_ptr.hbm [resolvable:$true] %s1842
          %1845 = dma.vmem_to_hbm [thread:$0]  %s1841, 64, %s1843, [#allocation13]
        $region68: #{tpu_custom_call.1} parent=35 // pred_fallthru
          _
        // Predicated region
        $region69: #{tpu_custom_call.1} parent=35 // pred_check
          %p1846 = pneg %p176
        $region70: #{tpu_custom_call.1} parent=35 // pred_check_branch
          %1848 = sbr.rel (%p1846) target = $region72
        $region71: #{tpu_custom_call.1} parent=35 // pred_region
          %1850 = vsyncadd [#allocation13], 0
          %s1852 = sshll.u32 [#allocation14], 4
          %s1853 = int_to_ptr.vmem [resolvable:$true] %s1852
          %s1854 = sshll.u32 %s6, 4
          %s1855 = int_to_ptr.hbm [resolvable:$true] %s1854
          %1857 = dma.vmem_to_hbm [thread:$0]  %s1853, 64, %s1855, [#allocation13]
        $region72: #{tpu_custom_call.1} parent=35 // pred_fallthru
          _
        // Predicated region
        $region73: #{tpu_custom_call.1} parent=35 // pred_check
          %p1858 = pneg %p155
        $region74: #{tpu_custom_call.1} parent=35 // pred_check_branch
          %1860 = sbr.rel (%p1858) target = $region76
        $region75: #{tpu_custom_call.1} parent=35 // pred_region
          %1862 = dma.done [#allocation13], 64
        $region76: #{tpu_custom_call.1} parent=35 // pred_fallthru
          _
        // Predicated region
        $region77: #{tpu_custom_call.1} parent=35 // pred_check
          %p1863 = pneg %p176
        $region78: #{tpu_custom_call.1} parent=35 // pred_check_branch
          %1865 = sbr.rel (%p1863) target = $region80
        $region79: #{tpu_custom_call.1} parent=35 // pred_region
          %1867 = dma.done [#allocation13], 64
        $region80: #{tpu_custom_call.1} parent=35 // pred_fallthru
          _
      $region36: #{tpu_custom_call.1} parent=5 // pred_fallthru
        _
      %p1868 = scmp.le.s32.totalorder 2, %s22
      // Predicated region
      $region81: #{tpu_custom_call.1} parent=5 // pred_check
        %p1869 = pneg %p1868
      $region82: #{tpu_custom_call.1} parent=5 // pred_check_branch
        %1871 = sbr.rel (%p1869) target = $region84
      $region83: #{tpu_custom_call.1} parent=5 // pred_region
        %s1872 = ssub.s32 %s22, 2
        // Predicated region
        $region85: #{tpu_custom_call.1} parent=83 // pred_check
          %p1873 = pneg %p140
        $region86: #{tpu_custom_call.1} parent=83 // pred_check_branch
          %1875 = sbr.rel (%p1873) target = $region88
        $region87: #{tpu_custom_call.1} parent=83 // pred_region
          %s1876 = sand.u32 %s125, 1
          %s1877 = scalar_lea.sflag [#allocation5], %s1876
          %s1878 = sand.u32 %s125, 1
          %s1879 = smul.addr %s1878, 32
          %s1880 = scalar_lea.vmem [#allocation11], %s1879
          %1882 = dma.done %s1877, 512
        $region88: #{tpu_custom_call.1} parent=83 // pred_fallthru
          _
      $region84: #{tpu_custom_call.1} parent=5 // pred_fallthru
        _
    $region6: #{tpu_custom_call.1} parent=1 // loop_footer
      %s26 = sadd.s32 1, %s22
    $region7: #{tpu_custom_call.1} parent=1 // loop_footer_branch
      %21 = sbr.rel target = $region3
    $region8: #{tpu_custom_call.1} parent=1 // loop_exit
      _
    %1883 = vsyncpa [#allocation4], 1
    %s1884 = scalar_lea.sflag [#allocation4], 1
    %1885 = vsyncpa %s1884, 1
    %1886 = vsyncpa [#allocation7], 1
    %1887 = vsyncpa [#allocation10], 1
    %1888 = vsyncpa [#allocation5], 1
    %s1889 = scalar_lea.sflag [#allocation5], 1
    %1890 = vsyncpa %s1889, 1
    %1891 = vsyncpa [#allocation13], 1

</llo_original>
